<compile_context>
chip_gen: v7x
topology: tpu7x:2x2x1
jax: 0.10.0
libtpu: 0.0.40
codegen_flags: <defaults>
</compile_context>

<pallas_src>
import functools

import jax
import jax.numpy as jnp
from jax.experimental import pallas as pl
from jax.experimental.pallas import tpu as pltpu


def _layernorm(x, gamma, beta, eps):
    mu = jnp.mean(x, axis=-1, keepdims=True)
    var = jnp.mean((x - mu) ** 2, axis=-1, keepdims=True)
    return (x - mu) * jax.lax.rsqrt(var + eps) * gamma + beta


def encoder_layer_kernel(x_ref,
                         win_ref, wout_ref, w1_ref, w2_ref,
                         vecs_ref, b1_ref,
                         o_ref, *, eps):
    cdt = win_ref.dtype                       # MXU matmul dtype (bf16 or f32)

    x32 = x_ref[...].astype(jnp.float32)      # residual path stays f32
    xm = x_ref[...].astype(cdt)

    vecs = vecs_ref[...]                      # (8, D) f32 packed vectors
    b_in, b_out = vecs[0:1, :], vecs[1:2, :]
    g1, be1 = vecs[2:3, :], vecs[3:4, :]
    b2 = vecs[4:5, :]
    g2, be2 = vecs[5:6, :], vecs[6:7, :]
    b1 = b1_ref[...]                          # (1, F) f32

    # --- MultiheadMLP: two chained d_model -> d_model linears ---
    src1 = jnp.dot(xm, win_ref[...], preferred_element_type=jnp.float32) + b_in
    proj = jnp.dot(src1.astype(cdt), wout_ref[...],
                   preferred_element_type=jnp.float32) + b_out

    # --- residual + LayerNorm1 (dropout1 = identity in eval) ---
    src2 = _layernorm(x32 + proj, g1, be1, eps)

    # --- feedforward: relu(linear1) -> linear2 (inner dropout = identity) ---
    h = jnp.maximum(
        jnp.dot(src2.astype(cdt), w1_ref[...],
                preferred_element_type=jnp.float32) + b1,
        0.0)
    ffn = jnp.dot(h.astype(cdt), w2_ref[...],
                  preferred_element_type=jnp.float32) + b2

    # --- residual + LayerNorm2 (dropout2 = identity in eval) ---
    o_ref[...] = _layernorm(src2 + ffn, g2, be2, eps).astype(o_ref.dtype)


def mlp_encoder_layer(src, params, *, eps=1e-5, row_tile=None,
                      compute_dtype=jnp.bfloat16):
    """src: (B, S, D). params: dict of PyTorch-convention weights (f32)."""
    B, S, D = src.shape
    F = params["w1"].shape[0]
    n_rows = B * S

    if row_tile is None:
        # Largest multiple of 128 covering the rows, capped at 512: full MXU
        # tiles, while large inputs still get >=2 grid steps (v7x: 2 TCs).
        row_tile = min(512, 128 * pl.cdiv(n_rows, 128))
    assert row_tile % 128 == 0, "row_tile must be a multiple of 128"

    n_pad = pl.cdiv(n_rows, row_tile) * row_tile
    x2d = src.reshape(n_rows, D)
    if n_pad != n_rows:
        x2d = jnp.pad(x2d, ((0, n_pad - n_rows), (0, 0)))

    # Pre-transpose so the kernel computes x @ W_t (PyTorch does x @ W.T + b)
    # and cast to the MXU dtype; accumulation inside the kernel is f32.
    win_t = jnp.asarray(params["win"].T, compute_dtype)    # (D, D)
    wout_t = jnp.asarray(params["wout"].T, compute_dtype)  # (D, D)
    w1_t = jnp.asarray(params["w1"].T, compute_dtype)      # (D, F)
    w2_t = jnp.asarray(params["w2"].T, compute_dtype)      # (F, D)

    # Pack the 7 width-D vectors into one (8, D) f32 block (row 7 = padding).
    vecs = jnp.stack([params["bin"], params["bout"],
                      params["g1"], params["be1"],
                      params["b2"], params["g2"], params["be2"],
                      jnp.zeros((D,), jnp.float32)], axis=0).astype(jnp.float32)
    b1 = params["b1"].reshape(1, F).astype(jnp.float32)

    const = lambda shape: pl.BlockSpec(shape, lambda i: (0, 0))

    # Rough VMEM footprint: pipelined (x2) weights + x/out tiles + f32
    # intermediates (incl. the (row_tile, F) ReLU activation). Cap at 64 MiB
    # so the request is also valid on v7x.
    w_bytes = jnp.dtype(compute_dtype).itemsize
    est = (2 * (2 * D * D + 2 * D * F) * w_bytes
           + 2 * (8 * D + F) * 4
           + 2 * 2 * row_tile * D * src.dtype.itemsize
           + 2 * row_tile * (4 * D + F) * 4)
    vmem_limit = int(min(64 * 2 ** 20, max(32 * 2 ** 20, 1.5 * est)))

    out = pl.pallas_call(
        functools.partial(encoder_layer_kernel, eps=eps),
        out_shape=jax.ShapeDtypeStruct((n_pad, D), src.dtype),
        grid_spec=pltpu.PrefetchScalarGridSpec(
            num_scalar_prefetch=0,
            grid=(n_pad // row_tile,),
            in_specs=[
                pl.BlockSpec((row_tile, D), lambda i: (i, 0)),  # x rows
                const((D, D)),                                  # Win^T
                const((D, D)),                                  # Wout^T
                const((D, F)),                                  # W1^T
                const((F, D)),                                  # W2^T
                const((8, D)),                                  # packed vectors
                const((1, F)),                                  # b1
            ],
            out_specs=pl.BlockSpec((row_tile, D), lambda i: (i, 0)),
        ),
        compiler_params=pltpu.CompilerParams(
            dimension_semantics=("parallel",),
            vmem_limit_bytes=vmem_limit),
    )(x2d, win_t, wout_t, w1_t, w2_t, vecs, b1)

    return out[:n_rows].reshape(B, S, D)


def _reference(src, p, eps=1e-5):
    mm = functools.partial(jnp.matmul, precision=jax.lax.Precision.HIGHEST)

    def ln(x, g, b):
        mu = jnp.mean(x, axis=-1, keepdims=True)
        var = jnp.mean((x - mu) ** 2, axis=-1, keepdims=True)
        return (x - mu) / jnp.sqrt(var + eps) * g + b

    src1 = mm(src, p["win"].T) + p["bin"]
    proj = mm(src1, p["wout"].T) + p["bout"]
    s2 = ln(src + proj, p["g1"], p["be1"])
    ffn = mm(jnp.maximum(mm(s2, p["w1"].T) + p["b1"], 0.0), p["w2"].T) + p["b2"]
    return ln(s2 + ffn, p["g2"], p["be2"])


def _init_params(key, d_model, dim_feedforward):
    ks = jax.random.split(key, 8)
    # xavier_uniform for in_proj_weight (as in _reset_parameters), bias = 0
    lim_in = (6.0 / (d_model + d_model)) ** 0.5
    win = jax.random.uniform(ks[0], (d_model, d_model), jnp.float32, -lim_in, lim_in)
    bin_ = jnp.zeros((d_model,), jnp.float32)
    lim = (1.0 / d_model) ** 0.5
    wout = jax.random.uniform(ks[1], (d_model, d_model), jnp.float32, -lim, lim)
    bout = jax.random.uniform(ks[2], (d_model,), jnp.float32, -lim, lim)
    w1 = jax.random.uniform(ks[3], (dim_feedforward, d_model), jnp.float32, -lim, lim)
    b1 = jax.random.uniform(ks[4], (dim_feedforward,), jnp.float32, -lim, lim)
    lim2 = (1.0 / dim_feedforward) ** 0.5
    w2 = jax.random.uniform(ks[5], (d_model, dim_feedforward), jnp.float32, -lim2, lim2)
    b2 = jax.random.uniform(ks[6], (d_model,), jnp.float32, -lim2, lim2)
    return dict(
        win=win, bin=bin_, wout=wout, bout=bout,
        w1=w1, b1=b1, w2=w2, b2=b2,
        g1=jnp.ones((d_model,), jnp.float32), be1=jnp.zeros((d_model,), jnp.float32),
        g2=jnp.ones((d_model,), jnp.float32), be2=jnp.zeros((d_model,), jnp.float32),
    )


if __name__ == "__main__":
    # Small but lane-dense shapes: D multiple of 128; 144 tokens exercises the
    # row padding / tail-tile path.
    B, S, D, FF = 2, 72, 128, 256
    key = jax.random.PRNGKey(0)
    k_x, k_p = jax.random.split(key)
    src = jax.random.normal(k_x, (B, S, D), jnp.float32)
    params = _init_params(k_p, D, FF)

    ref = _reference(src, params)

    # f32-matmul path: row_tile=128 -> 2 grid steps incl. a zero-padded tail.
    out_f32 = jax.block_until_ready(
        mlp_encoder_layer(src, params, compute_dtype=jnp.float32, row_tile=128))
    assert out_f32.shape == (B, S, D)
    assert jnp.allclose(out_f32, ref, atol=2e-3, rtol=2e-3), "f32 path mismatch"

    # Default perf path: bf16 MXU matmuls, f32 accumulation / LayerNorms.
    out_bf16 = jax.block_until_ready(mlp_encoder_layer(src, params))
    assert out_bf16.shape == (B, S, D)
    assert jnp.allclose(out_bf16, ref, atol=7.5e-2, rtol=5e-2), "bf16 path mismatch"

    print("KERNEL_OK")
</pallas_src>

<mosaic_0001>
module attributes {stable_mosaic.version = 11 : i64} {
  func.func @encoder_layer_kernel(%arg0: i32, %arg1: memref<128x128xf32, #tpu.memory_space<vmem>>, %arg2: memref<128x128xf32, #tpu.memory_space<vmem>>, %arg3: memref<128x128xf32, #tpu.memory_space<vmem>>, %arg4: memref<128x256xf32, #tpu.memory_space<vmem>>, %arg5: memref<256x128xf32, #tpu.memory_space<vmem>>, %arg6: memref<8x128xf32, #tpu.memory_space<vmem>>, %arg7: memref<1x256xf32, #tpu.memory_space<vmem>>, %arg8: memref<128x128xf32, #tpu.memory_space<vmem>>) attributes {dimension_semantics = [#tpu.dimension_semantics<parallel>], iteration_bounds = array<i64: 2>, scalar_prefetch = 0 : i64, scratch_operands = 0 : i64, tpu.core_type = #tpu.core_type<tc>, window_params = [{transform_indices = @transform_0, window_bounds = array<i64: 128, 128>}, {pipeline_mode = #tpu.pipeline_mode<synchronous>, transform_indices = @transform_1, window_bounds = array<i64: 128, 128>}, {pipeline_mode = #tpu.pipeline_mode<synchronous>, transform_indices = @transform_2, window_bounds = array<i64: 128, 128>}, {pipeline_mode = #tpu.pipeline_mode<synchronous>, transform_indices = @transform_3, window_bounds = array<i64: 128, 256>}, {pipeline_mode = #tpu.pipeline_mode<synchronous>, transform_indices = @transform_4, window_bounds = array<i64: 256, 128>}, {pipeline_mode = #tpu.pipeline_mode<synchronous>, transform_indices = @transform_5, window_bounds = array<i64: 8, 128>}, {pipeline_mode = #tpu.pipeline_mode<synchronous>, transform_indices = @transform_6, window_bounds = array<i64: 1, 256>}, {transform_indices = @transform_7, window_bounds = array<i64: 128, 128>}]} {
    %c0 = arith.constant 0 : index
    %c0_0 = arith.constant 0 : index
    %0 = vector.load %arg1[%c0, %c0_0] : memref<128x128xf32, #tpu.memory_space<vmem>>, vector<128x128xf32>
    %c0_1 = arith.constant 0 : index
    %c0_2 = arith.constant 0 : index
    %1 = vector.load %arg1[%c0_1, %c0_2] : memref<128x128xf32, #tpu.memory_space<vmem>>, vector<128x128xf32>
    %c0_3 = arith.constant 0 : index
    %c0_4 = arith.constant 0 : index
    %2 = vector.load %arg6[%c0_3, %c0_4] : memref<8x128xf32, #tpu.memory_space<vmem>>, vector<8x128xf32>
    %3 = vector.extract_strided_slice %2 {offsets = [0, 0], sizes = [1, 128], strides = [1, 1]} : vector<8x128xf32> to vector<1x128xf32>
    %4 = vector.extract_strided_slice %2 {offsets = [1, 0], sizes = [1, 128], strides = [1, 1]} : vector<8x128xf32> to vector<1x128xf32>
    %5 = vector.extract_strided_slice %2 {offsets = [2, 0], sizes = [1, 128], strides = [1, 1]} : vector<8x128xf32> to vector<1x128xf32>
    %6 = vector.extract_strided_slice %2 {offsets = [3, 0], sizes = [1, 128], strides = [1, 1]} : vector<8x128xf32> to vector<1x128xf32>
    %7 = vector.extract_strided_slice %2 {offsets = [4, 0], sizes = [1, 128], strides = [1, 1]} : vector<8x128xf32> to vector<1x128xf32>
    %8 = vector.extract_strided_slice %2 {offsets = [5, 0], sizes = [1, 128], strides = [1, 1]} : vector<8x128xf32> to vector<1x128xf32>
    %9 = vector.extract_strided_slice %2 {offsets = [6, 0], sizes = [1, 128], strides = [1, 1]} : vector<8x128xf32> to vector<1x128xf32>
    %c0_5 = arith.constant 0 : index
    %c0_6 = arith.constant 0 : index
    %10 = vector.load %arg7[%c0_5, %c0_6] : memref<1x256xf32, #tpu.memory_space<vmem>>, vector<1x256xf32>
    %c0_7 = arith.constant 0 : index
    %c0_8 = arith.constant 0 : index
    %11 = vector.load %arg2[%c0_7, %c0_8] : memref<128x128xf32, #tpu.memory_space<vmem>>, vector<128x128xf32>
    %cst = arith.constant dense<0.000000e+00> : vector<128x128xf32>
    %12 = tpu.matmul %1, %11, %cst {dimension_numbers = #tpu.dot_dimension_numbers<[1], [0], [0], [1], [0, 0, 1, 1], [], []>} : vector<128x128xf32>, vector<128x128xf32>, vector<128x128xf32> -> vector<128x128xf32>
    %13 = vector.broadcast %3 : vector<1x128xf32> to vector<128x128xf32>
    %14 = arith.addf %12, %13 : vector<128x128xf32>
    %c0_9 = arith.constant 0 : index
    %c0_10 = arith.constant 0 : index
    %15 = vector.load %arg3[%c0_9, %c0_10] : memref<128x128xf32, #tpu.memory_space<vmem>>, vector<128x128xf32>
    %cst_11 = arith.constant dense<0.000000e+00> : vector<128x128xf32>
    %16 = tpu.matmul %14, %15, %cst_11 {dimension_numbers = #tpu.dot_dimension_numbers<[1], [0], [0], [1], [0, 0, 1, 1], [], []>} : vector<128x128xf32>, vector<128x128xf32>, vector<128x128xf32> -> vector<128x128xf32>
    %17 = vector.broadcast %4 : vector<1x128xf32> to vector<128x128xf32>
    %18 = arith.addf %16, %17 : vector<128x128xf32>
    %19 = arith.addf %0, %18 : vector<128x128xf32>
    %cst_12 = arith.constant dense<0.000000e+00> : vector<128xf32>
    %20 = vector.multi_reduction <add>, %19, %cst_12 [1] : vector<128x128xf32> to vector<128xf32>
    %21 = vector.shape_cast %20 : vector<128xf32> to vector<128x1xf32>
    %cst_13 = arith.constant 1.280000e+02 : f32
    %22 = vector.broadcast %cst_13 : f32 to vector<128x1xf32>
    %23 = arith.divf %21, %22 : vector<128x1xf32>
    %24 = vector.broadcast %23 : vector<128x1xf32> to vector<128x128xf32>
    %25 = arith.subf %19, %24 : vector<128x128xf32>
    %26 = arith.mulf %25, %25 : vector<128x128xf32>
    %cst_14 = arith.constant dense<0.000000e+00> : vector<128xf32>
    %27 = vector.multi_reduction <add>, %26, %cst_14 [1] : vector<128x128xf32> to vector<128xf32>
    %28 = vector.shape_cast %27 : vector<128xf32> to vector<128x1xf32>
    %cst_15 = arith.constant 1.280000e+02 : f32
    %29 = vector.broadcast %cst_15 : f32 to vector<128x1xf32>
    %30 = arith.divf %28, %29 : vector<128x1xf32>
    %31 = vector.broadcast %23 : vector<128x1xf32> to vector<128x128xf32>
    %32 = arith.subf %19, %31 : vector<128x128xf32>
    %cst_16 = arith.constant 9.99999974E-6 : f32
    %33 = vector.broadcast %cst_16 : f32 to vector<128x1xf32>
    %34 = arith.addf %30, %33 : vector<128x1xf32>
    %35 = math.rsqrt %34 : vector<128x1xf32>
    %36 = vector.broadcast %35 : vector<128x1xf32> to vector<128x128xf32>
    %37 = arith.mulf %32, %36 : vector<128x128xf32>
    %38 = vector.broadcast %5 : vector<1x128xf32> to vector<128x128xf32>
    %39 = arith.mulf %37, %38 : vector<128x128xf32>
    %40 = vector.broadcast %6 : vector<1x128xf32> to vector<128x128xf32>
    %41 = arith.addf %39, %40 : vector<128x128xf32>
    %c0_17 = arith.constant 0 : index
    %c0_18 = arith.constant 0 : index
    %42 = vector.load %arg4[%c0_17, %c0_18] : memref<128x256xf32, #tpu.memory_space<vmem>>, vector<128x256xf32>
    %cst_19 = arith.constant dense<0.000000e+00> : vector<128x256xf32>
    %43 = tpu.matmul %41, %42, %cst_19 {dimension_numbers = #tpu.dot_dimension_numbers<[1], [0], [0], [1], [0, 0, 1, 1], [], []>} : vector<128x128xf32>, vector<128x256xf32>, vector<128x256xf32> -> vector<128x256xf32>
    %44 = vector.broadcast %10 : vector<1x256xf32> to vector<128x256xf32>
    %45 = arith.addf %43, %44 : vector<128x256xf32>
    %cst_20 = arith.constant 0.000000e+00 : f32
    %46 = vector.broadcast %cst_20 : f32 to vector<128x256xf32>
    %47 = arith.maximumf %45, %46 : vector<128x256xf32>
    %c0_21 = arith.constant 0 : index
    %c0_22 = arith.constant 0 : index
    %48 = vector.load %arg5[%c0_21, %c0_22] : memref<256x128xf32, #tpu.memory_space<vmem>>, vector<256x128xf32>
    %cst_23 = arith.constant dense<0.000000e+00> : vector<128x128xf32>
    %49 = tpu.matmul %47, %48, %cst_23 {dimension_numbers = #tpu.dot_dimension_numbers<[1], [0], [0], [1], [0, 0, 1, 1], [], []>} : vector<128x256xf32>, vector<256x128xf32>, vector<128x128xf32> -> vector<128x128xf32>
    %50 = vector.broadcast %7 : vector<1x128xf32> to vector<128x128xf32>
    %51 = arith.addf %49, %50 : vector<128x128xf32>
    %52 = arith.addf %41, %51 : vector<128x128xf32>
    %cst_24 = arith.constant dense<0.000000e+00> : vector<128xf32>
    %53 = vector.multi_reduction <add>, %52, %cst_24 [1] : vector<128x128xf32> to vector<128xf32>
    %54 = vector.shape_cast %53 : vector<128xf32> to vector<128x1xf32>
    %cst_25 = arith.constant 1.280000e+02 : f32
    %55 = vector.broadcast %cst_25 : f32 to vector<128x1xf32>
    %56 = arith.divf %54, %55 : vector<128x1xf32>
    %57 = vector.broadcast %56 : vector<128x1xf32> to vector<128x128xf32>
    %58 = arith.subf %52, %57 : vector<128x128xf32>
    %59 = arith.mulf %58, %58 : vector<128x128xf32>
    %cst_26 = arith.constant dense<0.000000e+00> : vector<128xf32>
    %60 = vector.multi_reduction <add>, %59, %cst_26 [1] : vector<128x128xf32> to vector<128xf32>
    %61 = vector.shape_cast %60 : vector<128xf32> to vector<128x1xf32>
    %cst_27 = arith.constant 1.280000e+02 : f32
    %62 = vector.broadcast %cst_27 : f32 to vector<128x1xf32>
    %63 = arith.divf %61, %62 : vector<128x1xf32>
    %64 = vector.broadcast %56 : vector<128x1xf32> to vector<128x128xf32>
    %65 = arith.subf %52, %64 : vector<128x128xf32>
    %cst_28 = arith.constant 9.99999974E-6 : f32
    %66 = vector.broadcast %cst_28 : f32 to vector<128x1xf32>
    %67 = arith.addf %63, %66 : vector<128x1xf32>
    %68 = math.rsqrt %67 : vector<128x1xf32>
    %69 = vector.broadcast %68 : vector<128x1xf32> to vector<128x128xf32>
    %70 = arith.mulf %65, %69 : vector<128x128xf32>
    %71 = vector.broadcast %8 : vector<1x128xf32> to vector<128x128xf32>
    %72 = arith.mulf %70, %71 : vector<128x128xf32>
    %73 = vector.broadcast %9 : vector<1x128xf32> to vector<128x128xf32>
    %74 = arith.addf %72, %73 : vector<128x128xf32>
    %c0_29 = arith.constant 0 : index
    %c0_30 = arith.constant 0 : index
    %75 = vector.load %arg8[%c0_29, %c0_30] : memref<128x128xf32, #tpu.memory_space<vmem>>, vector<128x128xf32>
    tpu.vector_store %arg8[%c0_29, %c0_30], %74 {strides = array<i32>} : memref<128x128xf32, #tpu.memory_space<vmem>>, vector<128x128xf32>,
    return
  }
  func.func @transform_0(%arg0: i32) -> (i32, i32) {
    %c0_i32 = arith.constant 0 : i32
    %c0_i32_0 = arith.constant 0 : i32
    return %arg0, %c0_i32 : i32, i32
  }
  func.func @transform_1(%arg0: i32) -> (i32, i32) {
    %c0_i32 = arith.constant 0 : i32
    %c0_i32_0 = arith.constant 0 : i32
    %c0_i32_1 = arith.constant 0 : i32
    return %c0_i32, %c0_i32_0 : i32, i32
  }
  func.func @transform_2(%arg0: i32) -> (i32, i32) {
    %c0_i32 = arith.constant 0 : i32
    %c0_i32_0 = arith.constant 0 : i32
    %c0_i32_1 = arith.constant 0 : i32
    return %c0_i32, %c0_i32_0 : i32, i32
  }
  func.func @transform_3(%arg0: i32) -> (i32, i32) {
    %c0_i32 = arith.constant 0 : i32
    %c0_i32_0 = arith.constant 0 : i32
    %c0_i32_1 = arith.constant 0 : i32
    return %c0_i32, %c0_i32_0 : i32, i32
  }
  func.func @transform_4(%arg0: i32) -> (i32, i32) {
    %c0_i32 = arith.constant 0 : i32
    %c0_i32_0 = arith.constant 0 : i32
    %c0_i32_1 = arith.constant 0 : i32
    return %c0_i32, %c0_i32_0 : i32, i32
  }
  func.func @transform_5(%arg0: i32) -> (i32, i32) {
    %c0_i32 = arith.constant 0 : i32
    %c0_i32_0 = arith.constant 0 : i32
    %c0_i32_1 = arith.constant 0 : i32
    return %c0_i32, %c0_i32_0 : i32, i32
  }
  func.func @transform_6(%arg0: i32) -> (i32, i32) {
    %c0_i32 = arith.constant 0 : i32
    %c0_i32_0 = arith.constant 0 : i32
    %c0_i32_1 = arith.constant 0 : i32
    return %c0_i32, %c0_i32_0 : i32, i32
  }
  func.func @transform_7(%arg0: i32) -> (i32, i32) {
    %c0_i32 = arith.constant 0 : i32
    %c0_i32_0 = arith.constant 0 : i32
    return %arg0, %c0_i32 : i32, i32
  }
}

</mosaic_0001>

<llo_original>
// kernel: tpu_custom_call.1
$region0: #{tpu_custom_call.1}
  #allocation0 [shape = 'u32[]', space=smem, size = 0x4, offset = 0x4, fixed_abs, tag = 'smem constant byte address 0x4 - core index']
  #allocation1 [shape = 'u32[144,128]{1,0:T(1,128)}', space=vmem, size = 0x12000, scoped, tag = 'internal scratch']
  %s0 = inlined_call_operand.hbm [shape: f32[256,128], index: 0, kind: input, shape index: {}]
  %s1 = inlined_call_operand.hbm [shape: f32[128,128], index: 1, kind: input, shape index: {}]
  %s2 = inlined_call_operand.hbm [shape: f32[128,128], index: 2, kind: input, shape index: {}]
  %s3 = inlined_call_operand.hbm [shape: f32[128,256], index: 3, kind: input, shape index: {}]
  %s4 = inlined_call_operand.hbm [shape: f32[256,128], index: 4, kind: input, shape index: {}]
  %s5 = inlined_call_operand.vmem [shape: f32[8,128], index: 5, kind: input, shape index: {}]
  %s6 = inlined_call_operand.vmem [shape: f32[1,256], index: 6, kind: input, shape index: {}]
  %s7 = inlined_call_operand.hbm [shape: f32[256,128], index: 7, kind: output, shape index: {}]
  %s8 = sld [smem:[#allocation0]]
  $region81: #{tpu_custom_call.1} parent=0
    _
  %s10 = ssub.s32 1, %s8
  %s11 = scalar_select 0, %s10, %s8
  $region1: #{tpu_custom_call.1} parent=0
    #allocation2 [shape = 'u8[131072]{0}', space=vmem, size = 0x20000, scoped, tag = 'input window, operand 0']
    #allocation3 [shape = 's32[2]{0}', space=sflag, size = 0x8, scoped, tag = 'scoped memory for tpu_custom_call.1']
    #allocation4 [shape = 's32[2]{0}', space=sflag, size = 0x8, scoped, tag = 'scoped memory for tpu_custom_call.1']
    #allocation5 [shape = 'u8[65536]{0}', space=vmem, size = 0x10000, scoped, tag = 'input window, operand 1, single buffered']
    #allocation6 [shape = 's32[1]{0}', space=sflag, size = 0x4, scoped, tag = 'scoped memory for tpu_custom_call.1']
    #allocation7 [shape = 'u8[65536]{0}', space=vmem, size = 0x10000, scoped, tag = 'input window, operand 2, single buffered']
    #allocation8 [shape = 'u8[131072]{0}', space=vmem, size = 0x20000, scoped, tag = 'input window, operand 3, single buffered']
    #allocation9 [shape = 's32[1]{0}', space=sflag, size = 0x4, scoped, tag = 'scoped memory for tpu_custom_call.1']
    #allocation10 [shape = 'u8[131072]{0}', space=vmem, size = 0x20000, scoped, tag = 'input window, operand 4, single buffered']
    #allocation11 [shape = 'u8[131072]{0}', space=vmem, size = 0x20000, scoped, tag = 'output window, operand 0']
    %12 = vsyncpa [#allocation3], 0
    %s13 = scalar_lea.sflag [#allocation3], 1
    %14 = vsyncpa %s13, 0
    %15 = vsyncpa [#allocation6], 0
    %16 = vsyncpa [#allocation9], 0
    %17 = vsyncpa [#allocation4], 0
    %s18 = scalar_lea.sflag [#allocation4], 1
    %19 = vsyncpa %s18, 0
    loop: start=0, step=1, limit=4
    $region2: #{tpu_custom_call.1} parent=1 // loop_pre_header
      _
    $region3: #{tpu_custom_call.1} parent=1 // loop_header
      %s21 = sphi 0, %s25
      %p22 = scmp.ge.s32.totalorder %s21, 4
      %s31 = sphi 0, %s33
      %s34 = sphi 0, %s31
      %s35 = sphi 0, %s34
      %s51 = sphi 0, %s35
      %s55 = sphi 0, %s55
      %s57 = sphi 0, %s55
      %s58 = sphi 0, %s57
      %s72 = sphi 0, %s58
      %s76 = sphi 0, %s76
      %s78 = sphi 0, %s76
      %s79 = sphi 0, %s78
      %s93 = sphi 0, %s79
      %s97 = sphi 0, %s97
      %s99 = sphi 0, %s97
      %s100 = sphi 0, %s99
      %s114 = sphi 0, %s100
      %s118 = sphi 0, %s118
      %s120 = sphi 0, %s118
      %s121 = sphi 0, %s120
      %s135 = sphi 0, %s121
      %s139 = sphi 0, %s139
      %s141 = sphi 0, %s139
      %s142 = sphi 0, %s141
      %s156 = sphi 0, %s142
      %s160 = sphi 0, %s160
      %s162 = sphi 0, %s160
      %s163 = sphi 0, %s162
      %s177 = sphi 0, %s163
      %s183 = sphi 0, %s185
      %s186 = sphi 0, %s183
      %s187 = sphi 0, %s186
      %s203 = sphi 0, %s187
    $region4: #{tpu_custom_call.1} parent=1 // loop_header_branch
      %24 = sbr.rel (%p22) target = $region8
    $region5: #{tpu_custom_call.1} parent=1 // loop_body
      %s26 = ssub.s32 %s21, 1
      %s27 = ssub.s32 %s21, 2
      %s28 = sadd.s32 %s21, 1
      %s29 = ssub.s32 %s21, %s28
      %p30 = scmp.eq.s32.totalorder %s29, 0
      %s32 = sadd.s32 %s31, 1
      %s33 = scalar_select %p30, %s31, %s32
      %p36 = pneg %p30
      %p37 = scmp.eq.s32.totalorder %s21, 1
      %p38 = por %p36, %p37
      %p39 = scmp.ne.s32.totalorder %s31, %s34
      %p40 = scmp.eq.s32.totalorder %s21, 0
      %p41 = por %p39, %p40
      %p42 = scmp.ne.s32.totalorder %s31, %s34
      %p43 = scmp.eq.s32.totalorder %s26, 1
      %p44 = por %p42, %p43
      %p45 = scmp.ne.s32.totalorder %s34, %s35
      %p46 = scmp.eq.s32.totalorder %s26, 0
      %p47 = por %p45, %p46
      %p48 = scmp.ne.s32.totalorder %s34, %s35
      %p49 = scmp.eq.s32.totalorder %s27, 1
      %p50 = por %p48, %p49
      %p52 = scmp.ne.s32.totalorder %s35, %s51
      %p53 = scmp.eq.s32.totalorder %s27, 0
      %p54 = por %p52, %p53
      %s56 = sadd.s32 %s55, 1
      %p59 = scmp.eq.s32.totalorder %s21, 1
      %p60 = scmp.ne.s32.totalorder %s55, %s57
      %p61 = scmp.eq.s32.totalorder %s21, 0
      %p62 = por %p60, %p61
      %p63 = scmp.ne.s32.totalorder %s55, %s57
      %p64 = scmp.eq.s32.totalorder %s26, 1
      %p65 = por %p63, %p64
      %p66 = scmp.ne.s32.totalorder %s57, %s58
      %p67 = scmp.eq.s32.totalorder %s26, 0
      %p68 = por %p66, %p67
      %p69 = scmp.ne.s32.totalorder %s57, %s58
      %p70 = scmp.eq.s32.totalorder %s27, 1
      %p71 = por %p69, %p70
      %p73 = scmp.ne.s32.totalorder %s58, %s72
      %p74 = scmp.eq.s32.totalorder %s27, 0
      %p75 = por %p73, %p74
      %s77 = sadd.s32 %s76, 1
      %p80 = scmp.eq.s32.totalorder %s21, 1
      %p81 = scmp.ne.s32.totalorder %s76, %s78
      %p82 = scmp.eq.s32.totalorder %s21, 0
      %p83 = por %p81, %p82
      %p84 = scmp.ne.s32.totalorder %s76, %s78
      %p85 = scmp.eq.s32.totalorder %s26, 1
      %p86 = por %p84, %p85
      %p87 = scmp.ne.s32.totalorder %s78, %s79
      %p88 = scmp.eq.s32.totalorder %s26, 0
      %p89 = por %p87, %p88
      %p90 = scmp.ne.s32.totalorder %s78, %s79
      %p91 = scmp.eq.s32.totalorder %s27, 1
      %p92 = por %p90, %p91
      %p94 = scmp.ne.s32.totalorder %s79, %s93
      %p95 = scmp.eq.s32.totalorder %s27, 0
      %p96 = por %p94, %p95
      %s98 = sadd.s32 %s97, 1
      %p101 = scmp.eq.s32.totalorder %s21, 1
      %p102 = scmp.ne.s32.totalorder %s97, %s99
      %p103 = scmp.eq.s32.totalorder %s21, 0
      %p104 = por %p102, %p103
      %p105 = scmp.ne.s32.totalorder %s97, %s99
      %p106 = scmp.eq.s32.totalorder %s26, 1
      %p107 = por %p105, %p106
      %p108 = scmp.ne.s32.totalorder %s99, %s100
      %p109 = scmp.eq.s32.totalorder %s26, 0
      %p110 = por %p108, %p109
      %p111 = scmp.ne.s32.totalorder %s99, %s100
      %p112 = scmp.eq.s32.totalorder %s27, 1
      %p113 = por %p111, %p112
      %p115 = scmp.ne.s32.totalorder %s100, %s114
      %p116 = scmp.eq.s32.totalorder %s27, 0
      %p117 = por %p115, %p116
      %s119 = sadd.s32 %s118, 1
      %p122 = scmp.eq.s32.totalorder %s21, 1
      %p123 = scmp.ne.s32.totalorder %s118, %s120
      %p124 = scmp.eq.s32.totalorder %s21, 0
      %p125 = por %p123, %p124
      %p126 = scmp.ne.s32.totalorder %s118, %s120
      %p127 = scmp.eq.s32.totalorder %s26, 1
      %p128 = por %p126, %p127
      %p129 = scmp.ne.s32.totalorder %s120, %s121
      %p130 = scmp.eq.s32.totalorder %s26, 0
      %p131 = por %p129, %p130
      %p132 = scmp.ne.s32.totalorder %s120, %s121
      %p133 = scmp.eq.s32.totalorder %s27, 1
      %p134 = por %p132, %p133
      %p136 = scmp.ne.s32.totalorder %s121, %s135
      %p137 = scmp.eq.s32.totalorder %s27, 0
      %p138 = por %p136, %p137
      %s140 = sadd.s32 %s139, 1
      %p143 = scmp.eq.s32.totalorder %s21, 1
      %p144 = scmp.ne.s32.totalorder %s139, %s141
      %p145 = scmp.eq.s32.totalorder %s21, 0
      %p146 = por %p144, %p145
      %p147 = scmp.ne.s32.totalorder %s139, %s141
      %p148 = scmp.eq.s32.totalorder %s26, 1
      %p149 = por %p147, %p148
      %p150 = scmp.ne.s32.totalorder %s141, %s142
      %p151 = scmp.eq.s32.totalorder %s26, 0
      %p152 = por %p150, %p151
      %p153 = scmp.ne.s32.totalorder %s141, %s142
      %p154 = scmp.eq.s32.totalorder %s27, 1
      %p155 = por %p153, %p154
      %p157 = scmp.ne.s32.totalorder %s142, %s156
      %p158 = scmp.eq.s32.totalorder %s27, 0
      %p159 = por %p157, %p158
      %s161 = sadd.s32 %s160, 1
      %p164 = scmp.eq.s32.totalorder %s21, 1
      %p165 = scmp.ne.s32.totalorder %s160, %s162
      %p166 = scmp.eq.s32.totalorder %s21, 0
      %p167 = por %p165, %p166
      %p168 = scmp.ne.s32.totalorder %s160, %s162
      %p169 = scmp.eq.s32.totalorder %s26, 1
      %p170 = por %p168, %p169
      %p171 = scmp.ne.s32.totalorder %s162, %s163
      %p172 = scmp.eq.s32.totalorder %s26, 0
      %p173 = por %p171, %p172
      %p174 = scmp.ne.s32.totalorder %s162, %s163
      %p175 = scmp.eq.s32.totalorder %s27, 1
      %p176 = por %p174, %p175
      %p178 = scmp.ne.s32.totalorder %s163, %s177
      %p179 = scmp.eq.s32.totalorder %s27, 0
      %p180 = por %p178, %p179
      %s181 = ssub.s32 %s21, %s28
      %p182 = scmp.eq.s32.totalorder %s181, 0
      %s184 = sadd.s32 %s183, 1
      %s185 = scalar_select %p182, %s183, %s184
      %p188 = pneg %p182
      %p189 = scmp.eq.s32.totalorder %s21, 1
      %p190 = por %p188, %p189
      %p191 = scmp.ne.s32.totalorder %s183, %s186
      %p192 = scmp.eq.s32.totalorder %s21, 0
      %p193 = por %p191, %p192
      %p194 = scmp.ne.s32.totalorder %s183, %s186
      %p195 = scmp.eq.s32.totalorder %s26, 1
      %p196 = por %p194, %p195
      %p197 = scmp.ne.s32.totalorder %s186, %s187
      %p198 = scmp.eq.s32.totalorder %s26, 0
      %p199 = por %p197, %p198
      %p200 = scmp.ne.s32.totalorder %s186, %s187
      %p201 = scmp.eq.s32.totalorder %s27, 1
      %p202 = por %p200, %p201
      %p204 = scmp.ne.s32.totalorder %s187, %s203
      %p205 = scmp.eq.s32.totalorder %s27, 0
      %p206 = por %p204, %p205
      %p207 = scmp.le.s32.totalorder 1, %s21
      %p208 = scmp.lt.s32.totalorder %s21, 3
      %p209 = pnand %p207, %p208
      %p210 = pneg %p209
      // Predicated region
      $region9: #{tpu_custom_call.1} parent=5 // pred_check
        _
      $region10: #{tpu_custom_call.1} parent=5 // pred_check_branch
        %212 = sbr.rel (%p209) target = $region12
      $region11: #{tpu_custom_call.1} parent=5 // pred_region
        %s213 = ssub.s32 %s21, 1
        // Predicated region
        $region13: #{tpu_custom_call.1} parent=11 // pred_check
          %p214 = pneg %p68
        $region14: #{tpu_custom_call.1} parent=11 // pred_check_branch
          %216 = sbr.rel (%p214) target = $region16
        $region15: #{tpu_custom_call.1} parent=11 // pred_region
          %s218 = ssub.s32 2048, 2048
          %219 = vsyncadd [#allocation6], %s218
          %s220 = sshll.u32 [#allocation5], 4
          %s221 = int_to_ptr.vmem [resolvable:$true] %s220
          %226 = dma.hbm_to_vmem [thread:$0]  %s1, 2048, %s221, [#allocation6], 128, 128, 8
        $region16: #{tpu_custom_call.1} parent=11 // pred_fallthru
          _
        // Predicated region
        $region17: #{tpu_custom_call.1} parent=11 // pred_check
          %p227 = pneg %p89
        $region18: #{tpu_custom_call.1} parent=11 // pred_check_branch
          %229 = sbr.rel (%p227) target = $region20
        $region19: #{tpu_custom_call.1} parent=11 // pred_region
          %s231 = ssub.s32 2048, 2048
          %232 = vsyncadd [#allocation6], %s231
          %s233 = sshll.u32 [#allocation7], 4
          %s234 = int_to_ptr.vmem [resolvable:$true] %s233
          %239 = dma.hbm_to_vmem [thread:$0]  %s2, 2048, %s234, [#allocation6], 128, 128, 8
        $region20: #{tpu_custom_call.1} parent=11 // pred_fallthru
          _
        // Predicated region
        $region21: #{tpu_custom_call.1} parent=11 // pred_check
          %p240 = pneg %p110
        $region22: #{tpu_custom_call.1} parent=11 // pred_check_branch
          %242 = sbr.rel (%p240) target = $region24
        $region23: #{tpu_custom_call.1} parent=11 // pred_region
          %s244 = ssub.s32 4096, 4096
          %245 = vsyncadd [#allocation9], %s244
          %s246 = sshll.u32 [#allocation8], 4
          %s247 = int_to_ptr.vmem [resolvable:$true] %s246
          %252 = dma.hbm_to_vmem [thread:$0]  %s3, 4096, %s247, [#allocation9], 256, 256, 16
        $region24: #{tpu_custom_call.1} parent=11 // pred_fallthru
          _
        // Predicated region
        $region25: #{tpu_custom_call.1} parent=11 // pred_check
          %p253 = pneg %p131
        $region26: #{tpu_custom_call.1} parent=11 // pred_check_branch
          %255 = sbr.rel (%p253) target = $region28
        $region27: #{tpu_custom_call.1} parent=11 // pred_region
          %s257 = ssub.s32 4096, 4096
          %258 = vsyncadd [#allocation9], %s257
          %s259 = sshll.u32 [#allocation10], 4
          %s260 = int_to_ptr.vmem [resolvable:$true] %s259
          %265 = dma.hbm_to_vmem [thread:$0]  %s4, 4096, %s260, [#allocation9], 128, 128, 8
        $region28: #{tpu_custom_call.1} parent=11 // pred_fallthru
          _
        // Predicated region
        $region29: #{tpu_custom_call.1} parent=11 // pred_check
          %p266 = pneg %p152
        $region30: #{tpu_custom_call.1} parent=11 // pred_check_branch
          %268 = sbr.rel (%p266) target = $region32
        $region31: #{tpu_custom_call.1} parent=11 // pred_region
          _
        $region32: #{tpu_custom_call.1} parent=11 // pred_fallthru
          _
        // Predicated region
        $region33: #{tpu_custom_call.1} parent=11 // pred_check
          %p269 = pneg %p173
        $region34: #{tpu_custom_call.1} parent=11 // pred_check_branch
          %271 = sbr.rel (%p269) target = $region36
        $region35: #{tpu_custom_call.1} parent=11 // pred_region
          _
        $region36: #{tpu_custom_call.1} parent=11 // pred_fallthru
          _
      $region12: #{tpu_custom_call.1} parent=5 // pred_fallthru
        _
      %p272 = scmp.lt.s32.totalorder %s21, 2
      // Predicated region
      $region37: #{tpu_custom_call.1} parent=5 // pred_check
        %p273 = pneg %p272
      $region38: #{tpu_custom_call.1} parent=5 // pred_check_branch
        %275 = sbr.rel (%p273) target = $region40
      $region39: #{tpu_custom_call.1} parent=5 // pred_region
        // Predicated region
        $region41: #{tpu_custom_call.1} parent=39 // pred_check
          %p276 = pneg %p41
        $region42: #{tpu_custom_call.1} parent=39 // pred_check_branch
          %278 = sbr.rel (%p276) target = $region44
        $region43: #{tpu_custom_call.1} parent=39 // pred_region
          %s279 = sand.u32 %s31, 1
          %s280 = scalar_lea.sflag [#allocation3], %s279
          %s281 = sand.u32 %s31, 1
          %s282 = smul.addr %s281, 128
          %s283 = scalar_lea.vmem [#allocation2], %s282
          %s284 = smul.u32 16, %s21
          %s286 = ssub.s32 2048, 2048
          %287 = vsyncadd %s280, %s286
          %s288 = smul.addr %s284, 128
          %s289 = scalar_lea.hbm %s0, %s288
          %s290 = sshll.u32 %s283, 4
          %s291 = int_to_ptr.vmem [resolvable:$true] %s290
          %296 = dma.hbm_to_vmem [thread:$0]  %s289, 2048, %s291, %s280, 128, 128, 8
        $region44: #{tpu_custom_call.1} parent=39 // pred_fallthru
          _
      $region40: #{tpu_custom_call.1} parent=5 // pred_fallthru
        _
      %p297 = scmp.le.s32.totalorder 1, %s21
      %p298 = scmp.lt.s32.totalorder %s21, 3
      %p299 = pnand %p297, %p298
      %p300 = pneg %p299
      // Predicated region
      $region45: #{tpu_custom_call.1} parent=5 // pred_check
        _
      $region46: #{tpu_custom_call.1} parent=5 // pred_check_branch
        %302 = sbr.rel (%p299) target = $region48
      $region47: #{tpu_custom_call.1} parent=5 // pred_region
        %s303 = ssub.s32 %s21, 1
        %s304 = sand.u32 %s34, 1
        %s305 = scalar_lea.sflag [#allocation3], %s304
        %s306 = sand.u32 %s34, 1
        %s307 = smul.addr %s306, 128
        %s308 = scalar_lea.vmem [#allocation2], %s307
        // Predicated region
        $region49: #{tpu_custom_call.1} parent=47 // pred_check
          %p309 = pneg %p47
        $region50: #{tpu_custom_call.1} parent=47 // pred_check_branch
          %311 = sbr.rel (%p309) target = $region52
        $region51: #{tpu_custom_call.1} parent=47 // pred_region
          %312 = dma.done %s305, 2048
        $region52: #{tpu_custom_call.1} parent=47 // pred_fallthru
          _
        // Predicated region
        $region53: #{tpu_custom_call.1} parent=47 // pred_check
          %p313 = pneg %p68
        $region54: #{tpu_custom_call.1} parent=47 // pred_check_branch
          %315 = sbr.rel (%p313) target = $region56
        $region55: #{tpu_custom_call.1} parent=47 // pred_region
          %316 = dma.done [#allocation6], 2048
        $region56: #{tpu_custom_call.1} parent=47 // pred_fallthru
          _
        // Predicated region
        $region57: #{tpu_custom_call.1} parent=47 // pred_check
          %p317 = pneg %p89
        $region58: #{tpu_custom_call.1} parent=47 // pred_check_branch
          %319 = sbr.rel (%p317) target = $region60
        $region59: #{tpu_custom_call.1} parent=47 // pred_region
          %320 = dma.done [#allocation6], 2048
        $region60: #{tpu_custom_call.1} parent=47 // pred_fallthru
          _
        // Predicated region
        $region61: #{tpu_custom_call.1} parent=47 // pred_check
          %p321 = pneg %p110
        $region62: #{tpu_custom_call.1} parent=47 // pred_check_branch
          %323 = sbr.rel (%p321) target = $region64
        $region63: #{tpu_custom_call.1} parent=47 // pred_region
          %324 = dma.done [#allocation9], 4096
        $region64: #{tpu_custom_call.1} parent=47 // pred_fallthru
          _
        // Predicated region
        $region65: #{tpu_custom_call.1} parent=47 // pred_check
          %p325 = pneg %p131
        $region66: #{tpu_custom_call.1} parent=47 // pred_check_branch
          %327 = sbr.rel (%p325) target = $region68
        $region67: #{tpu_custom_call.1} parent=47 // pred_region
          %328 = dma.done [#allocation9], 4096
        $region68: #{tpu_custom_call.1} parent=47 // pred_fallthru
          _
        %s329 = sand.u32 %s34, 1
        %s330 = scalar_lea.sflag [#allocation3], %s329
        %s331 = sand.u32 %s34, 1
        %s332 = smul.addr %s331, 128
        %s333 = scalar_lea.vmem [#allocation2], %s332
        %p334 = pneg %p47
        %p335 = pneg %p44
        %p336 = pneg %p68
        %p337 = pneg %p65
        %p338 = pneg %p89
        %p339 = pneg %p86
        %p340 = pneg %p110
        %p341 = pneg %p107
        %p342 = pneg %p131
        %p343 = pneg %p128
        %p344 = pneg %p152
        %p345 = pneg %p149
        %p346 = pneg %p173
        %p347 = pneg %p170
        %p348 = pneg %p199
        %p349 = pneg %p196
        %s350 = sand.u32 %s186, 1
        %s351 = scalar_lea.sflag [#allocation4], %s350
        %s352 = sand.u32 %s186, 1
        %s353 = smul.addr %s352, 128
        %s354 = scalar_lea.vmem [#allocation11], %s353
        %s355 = smul.u32 16, %s26
        %s356 = smul.u32 16, %s26
        %v357 = vld [vmem:[%s308] sm:$0xff]
        %v358 = vld [vmem:[%s308 + $0x8] sm:$0xff]
        %v359 = vld [vmem:[%s308 + $0x10] sm:$0xff]
        %v360 = vld [vmem:[%s308 + $0x18] sm:$0xff]
        %v361 = vld [vmem:[%s308 + $0x20] sm:$0xff]
        %v362 = vld [vmem:[%s308 + $0x28] sm:$0xff]
        %v363 = vld [vmem:[%s308 + $0x30] sm:$0xff]
        %v364 = vld [vmem:[%s308 + $0x38] sm:$0xff]
        %v365 = vld [vmem:[%s308 + $0x40] sm:$0xff]
        %v366 = vld [vmem:[%s308 + $0x48] sm:$0xff]
        %v367 = vld [vmem:[%s308 + $0x50] sm:$0xff]
        %v368 = vld [vmem:[%s308 + $0x58] sm:$0xff]
        %v369 = vld [vmem:[%s308 + $0x60] sm:$0xff]
        %v370 = vld [vmem:[%s308 + $0x68] sm:$0xff]
        %v371 = vld [vmem:[%s308 + $0x70] sm:$0xff]
        %v372 = vld [vmem:[%s308 + $0x78] sm:$0xff]
        %v373 = vld [vmem:[%s5] sm:$0xff]
        %v374 = vld [vmem:[%s6] sm:$0x3]
        %v375 = vld [vmem:[#allocation5] sm:$0xff]
        %v376 = vld [vmem:[#allocation5 + $0x8] sm:$0xff]
        %v377 = vld [vmem:[#allocation5 + $0x10] sm:$0xff]
        %v378 = vld [vmem:[#allocation5 + $0x18] sm:$0xff]
        %v379 = vld [vmem:[#allocation5 + $0x20] sm:$0xff]
        %v380 = vld [vmem:[#allocation5 + $0x28] sm:$0xff]
        %v381 = vld [vmem:[#allocation5 + $0x30] sm:$0xff]
        %v382 = vld [vmem:[#allocation5 + $0x38] sm:$0xff]
        %v383 = vld [vmem:[#allocation5 + $0x40] sm:$0xff]
        %v384 = vld [vmem:[#allocation5 + $0x48] sm:$0xff]
        %v385 = vld [vmem:[#allocation5 + $0x50] sm:$0xff]
        %v386 = vld [vmem:[#allocation5 + $0x58] sm:$0xff]
        %v387 = vld [vmem:[#allocation5 + $0x60] sm:$0xff]
        %v388 = vld [vmem:[#allocation5 + $0x68] sm:$0xff]
        %v389 = vld [vmem:[#allocation5 + $0x70] sm:$0xff]
        %v390 = vld [vmem:[#allocation5 + $0x78] sm:$0xff]
        %v391 = vlaneseq
        %v392 = vshrl.u32 %v391, 7
        %v393 = vsub.s32 0, %v392
        %v394 = vrot.slane %v373, %v393
        %395 = vmatprep.subr.mxu0 0.0
        %396 = vmatpush1.msra.mxu0 %v375
        %397 = vmatprep.subr.mxu0 0.0
        %398 = vmatpush1.msra.mxu0 %v376
        %399 = vmatprep.subr.mxu0 0.0
        %400 = vmatpush1.msra.mxu0 %v377
        %401 = vmatprep.subr.mxu0 0.0
        %402 = vmatpush1.msra.mxu0 %v378
        %403 = vmatprep.subr.mxu0 0.0
        %404 = vmatpush1.msra.mxu0 %v379
        %405 = vmatprep.subr.mxu0 0.0
        %406 = vmatpush1.msra.mxu0 %v380
        %407 = vmatprep.subr.mxu0 0.0
        %408 = vmatpush1.msra.mxu0 %v381
        %409 = vmatprep.subr.mxu0 0.0
        %410 = vmatpush1.msra.mxu0 %v382
        %411 = vmatprep.subr.mxu0 0.0
        %412 = vmatpush1.msra.mxu0 %v383
        %413 = vmatprep.subr.mxu0 0.0
        %414 = vmatpush1.msra.mxu0 %v384
        %415 = vmatprep.subr.mxu0 0.0
        %416 = vmatpush1.msra.mxu0 %v385
        %417 = vmatprep.subr.mxu0 0.0
        %418 = vmatpush1.msra.mxu0 %v386
        %419 = vmatprep.subr.mxu0 0.0
        %420 = vmatpush1.msra.mxu0 %v387
        %421 = vmatprep.subr.mxu0 0.0
        %422 = vmatpush1.msra.mxu0 %v388
        %423 = vmatprep.subr.mxu0 0.0
        %424 = vmatpush1.msra.mxu0 %v389
        %425 = vmatprep.subr.mxu0 0.0
        %426 = vmatpush1.msra.mxu0 %v390
        %427 = vmatprep.subr.mxu0 0.0
        %428 = vmatpush1.msra.mxu0 0.0
        %429 = vmatprep.subr.mxu0 0.0
        %430 = vmatpush1.msra.mxu0 0.0
        %431 = vmatprep.subr.mxu0 0.0
        %432 = vmatpush1.msra.mxu0 0.0
        %433 = vmatprep.subr.mxu0 0.0
        %434 = vmatpush1.msra.mxu0 0.0
        %435 = vmatprep.subr.mxu0 0.0
        %436 = vmatpush1.msra.mxu0 0.0
        %437 = vmatprep.subr.mxu0 0.0
        %438 = vmatpush1.msra.mxu0 0.0
        %439 = vmatprep.subr.mxu0 0.0
        %440 = vmatpush1.msra.mxu0 0.0
        %441 = vmatprep.subr.mxu0 0.0
        %442 = vmatpush1.msra.mxu0 0.0
        %443 = vmatprep.subr.mxu0 0.0
        %444 = vmatpush1.msra.mxu0 0.0
        %445 = vmatprep.subr.mxu0 0.0
        %446 = vmatpush1.msra.mxu0 0.0
        %447 = vmatprep.subr.mxu0 0.0
        %448 = vmatpush1.msra.mxu0 0.0
        %449 = vmatprep.subr.mxu0 0.0
        %450 = vmatpush1.msra.mxu0 0.0
        %451 = vmatprep.subr.mxu0 0.0
        %452 = vmatpush1.msra.mxu0 0.0
        %453 = vmatprep.subr.mxu0 0.0
        %454 = vmatpush1.msra.mxu0 0.0
        %455 = vmatprep.subr.mxu0 0.0
        %456 = vmatpush1.msra.mxu0 0.0
        %457 = vmatprep.subr.mxu0 0.0
        %458 = vmatpush1.msra.mxu0 0.0
        %459 = vmatprep.mubr.f32.mxu0 0.0
        %460 = vmatmul.mubr.f32.gmra.mrb[0].mxu0 %v357
        %v461 = vpop.f32.mrb[0].mxu0
        %v462 = vadd.f32 %v394, %v461
        %v463 = vpop.f32.mrb[0].mxu0
        %464 = vmatprep.mubr.f32.mxu0 0.0
        %465 = vmatmul.mubr.f32.gmra.mrb[0].mxu0 %v358
        %v466 = vpop.f32.mrb[0].mxu0
        %v467 = vadd.f32 %v394, %v466
        %v468 = vpop.f32.mrb[0].mxu0
        %469 = vmatprep.mubr.f32.mxu0 0.0
        %470 = vmatmul.mubr.f32.gmra.mrb[0].mxu0 %v359
        %v471 = vpop.f32.mrb[0].mxu0
        %v472 = vadd.f32 %v394, %v471
        %v473 = vpop.f32.mrb[0].mxu0
        %474 = vmatprep.mubr.f32.mxu0 0.0
        %475 = vmatmul.mubr.f32.gmra.mrb[0].mxu0 %v360
        %v476 = vpop.f32.mrb[0].mxu0
        %v477 = vadd.f32 %v394, %v476
        %v478 = vpop.f32.mrb[0].mxu0
        %479 = vmatprep.mubr.f32.mxu0 0.0
        %480 = vmatmul.mubr.f32.gmra.mrb[0].mxu0 %v361
        %v481 = vpop.f32.mrb[0].mxu0
        %v482 = vadd.f32 %v394, %v481
        %v483 = vpop.f32.mrb[0].mxu0
        %484 = vmatprep.mubr.f32.mxu0 0.0
        %485 = vmatmul.mubr.f32.gmra.mrb[0].mxu0 %v362
        %v486 = vpop.f32.mrb[0].mxu0
        %v487 = vadd.f32 %v394, %v486
        %v488 = vpop.f32.mrb[0].mxu0
        %489 = vmatprep.mubr.f32.mxu0 0.0
        %490 = vmatmul.mubr.f32.gmra.mrb[0].mxu0 %v363
        %v491 = vpop.f32.mrb[0].mxu0
        %v492 = vadd.f32 %v394, %v491
        %v493 = vpop.f32.mrb[0].mxu0
        %494 = vmatprep.mubr.f32.mxu0 0.0
        %495 = vmatmul.mubr.f32.gmra.mrb[0].mxu0 %v364
        %v496 = vpop.f32.mrb[0].mxu0
        %v497 = vadd.f32 %v394, %v496
        %v498 = vpop.f32.mrb[0].mxu0
        %499 = vmatprep.mubr.f32.mxu0 0.0
        %500 = vmatmul.mubr.f32.gmra.mrb[0].mxu0 %v365
        %v501 = vpop.f32.mrb[0].mxu0
        %v502 = vadd.f32 %v394, %v501
        %v503 = vpop.f32.mrb[0].mxu0
        %504 = vmatprep.mubr.f32.mxu0 0.0
        %505 = vmatmul.mubr.f32.gmra.mrb[0].mxu0 %v366
        %v506 = vpop.f32.mrb[0].mxu0
        %v507 = vadd.f32 %v394, %v506
        %v508 = vpop.f32.mrb[0].mxu0
        %509 = vmatprep.mubr.f32.mxu0 0.0
        %510 = vmatmul.mubr.f32.gmra.mrb[0].mxu0 %v367
        %v511 = vpop.f32.mrb[0].mxu0
        %v512 = vadd.f32 %v394, %v511
        %v513 = vpop.f32.mrb[0].mxu0
        %514 = vmatprep.mubr.f32.mxu0 0.0
        %515 = vmatmul.mubr.f32.gmra.mrb[0].mxu0 %v368
        %v516 = vpop.f32.mrb[0].mxu0
        %v517 = vadd.f32 %v394, %v516
        %v518 = vpop.f32.mrb[0].mxu0
        %519 = vmatprep.mubr.f32.mxu0 0.0
        %520 = vmatmul.mubr.f32.gmra.mrb[0].mxu0 %v369
        %v521 = vpop.f32.mrb[0].mxu0
        %v522 = vadd.f32 %v394, %v521
        %v523 = vpop.f32.mrb[0].mxu0
        %524 = vmatprep.mubr.f32.mxu0 0.0
        %525 = vmatmul.mubr.f32.gmra.mrb[0].mxu0 %v370
        %v526 = vpop.f32.mrb[0].mxu0
        %v527 = vadd.f32 %v394, %v526
        %v528 = vpop.f32.mrb[0].mxu0
        %529 = vmatprep.mubr.f32.mxu0 0.0
        %530 = vmatmul.mubr.f32.gmra.mrb[0].mxu0 %v371
        %v531 = vpop.f32.mrb[0].mxu0
        %v532 = vadd.f32 %v394, %v531
        %v533 = vpop.f32.mrb[0].mxu0
        %534 = vmatprep.mubr.f32.mxu0 0.0
        %535 = vmatmul.mubr.f32.gmra.mrb[0].mxu0 %v372
        %v536 = vpop.f32.mrb[0].mxu0
        %v537 = vadd.f32 %v394, %v536
        %v538 = vpop.f32.mrb[0].mxu0
        %539 = vdwg.mxu0
        %v540 = vld [vmem:[#allocation7] sm:$0xff]
        %v541 = vld [vmem:[#allocation7 + $0x8] sm:$0xff]
        %v542 = vld [vmem:[#allocation7 + $0x10] sm:$0xff]
        %v543 = vld [vmem:[#allocation7 + $0x18] sm:$0xff]
        %v544 = vld [vmem:[#allocation7 + $0x20] sm:$0xff]
        %v545 = vld [vmem:[#allocation7 + $0x28] sm:$0xff]
        %v546 = vld [vmem:[#allocation7 + $0x30] sm:$0xff]
        %v547 = vld [vmem:[#allocation7 + $0x38] sm:$0xff]
        %v548 = vld [vmem:[#allocation7 + $0x40] sm:$0xff]
        %v549 = vld [vmem:[#allocation7 + $0x48] sm:$0xff]
        %v550 = vld [vmem:[#allocation7 + $0x50] sm:$0xff]
        %v551 = vld [vmem:[#allocation7 + $0x58] sm:$0xff]
        %v552 = vld [vmem:[#allocation7 + $0x60] sm:$0xff]
        %v553 = vld [vmem:[#allocation7 + $0x68] sm:$0xff]
        %v554 = vld [vmem:[#allocation7 + $0x70] sm:$0xff]
        %v555 = vld [vmem:[#allocation7 + $0x78] sm:$0xff]
        %v556 = vlaneseq
        %v557 = vshrl.u32 %v556, 7
        %v558 = vsub.s32 1, %v557
        %v559 = vrot.slane %v373, %v558
        %560 = vmatprep.subr.mxu0 0.0
        %561 = vmatpush1.msra.mxu0 %v540
        %562 = vmatprep.subr.mxu0 0.0
        %563 = vmatpush1.msra.mxu0 %v541
        %564 = vmatprep.subr.mxu0 0.0
        %565 = vmatpush1.msra.mxu0 %v542
        %566 = vmatprep.subr.mxu0 0.0
        %567 = vmatpush1.msra.mxu0 %v543
        %568 = vmatprep.subr.mxu0 0.0
        %569 = vmatpush1.msra.mxu0 %v544
        %570 = vmatprep.subr.mxu0 0.0
        %571 = vmatpush1.msra.mxu0 %v545
        %572 = vmatprep.subr.mxu0 0.0
        %573 = vmatpush1.msra.mxu0 %v546
        %574 = vmatprep.subr.mxu0 0.0
        %575 = vmatpush1.msra.mxu0 %v547
        %576 = vmatprep.subr.mxu0 0.0
        %577 = vmatpush1.msra.mxu0 %v548
        %578 = vmatprep.subr.mxu0 0.0
        %579 = vmatpush1.msra.mxu0 %v549
        %580 = vmatprep.subr.mxu0 0.0
        %581 = vmatpush1.msra.mxu0 %v550
        %582 = vmatprep.subr.mxu0 0.0
        %583 = vmatpush1.msra.mxu0 %v551
        %584 = vmatprep.subr.mxu0 0.0
        %585 = vmatpush1.msra.mxu0 %v552
        %586 = vmatprep.subr.mxu0 0.0
        %587 = vmatpush1.msra.mxu0 %v553
        %588 = vmatprep.subr.mxu0 0.0
        %589 = vmatpush1.msra.mxu0 %v554
        %590 = vmatprep.subr.mxu0 0.0
        %591 = vmatpush1.msra.mxu0 %v555
        %592 = vmatprep.subr.mxu0 0.0
        %593 = vmatpush1.msra.mxu0 0.0
        %594 = vmatprep.subr.mxu0 0.0
        %595 = vmatpush1.msra.mxu0 0.0
        %596 = vmatprep.subr.mxu0 0.0
        %597 = vmatpush1.msra.mxu0 0.0
        %598 = vmatprep.subr.mxu0 0.0
        %599 = vmatpush1.msra.mxu0 0.0
        %600 = vmatprep.subr.mxu0 0.0
        %601 = vmatpush1.msra.mxu0 0.0
        %602 = vmatprep.subr.mxu0 0.0
        %603 = vmatpush1.msra.mxu0 0.0
        %604 = vmatprep.subr.mxu0 0.0
        %605 = vmatpush1.msra.mxu0 0.0
        %606 = vmatprep.subr.mxu0 0.0
        %607 = vmatpush1.msra.mxu0 0.0
        %608 = vmatprep.subr.mxu0 0.0
        %609 = vmatpush1.msra.mxu0 0.0
        %610 = vmatprep.subr.mxu0 0.0
        %611 = vmatpush1.msra.mxu0 0.0
        %612 = vmatprep.subr.mxu0 0.0
        %613 = vmatpush1.msra.mxu0 0.0
        %614 = vmatprep.subr.mxu0 0.0
        %615 = vmatpush1.msra.mxu0 0.0
        %616 = vmatprep.subr.mxu0 0.0
        %617 = vmatpush1.msra.mxu0 0.0
        %618 = vmatprep.subr.mxu0 0.0
        %619 = vmatpush1.msra.mxu0 0.0
        %620 = vmatprep.subr.mxu0 0.0
        %621 = vmatpush1.msra.mxu0 0.0
        %622 = vmatprep.subr.mxu0 0.0
        %623 = vmatpush1.msra.mxu0 0.0
        %624 = vmatprep.mubr.f32.mxu0 0.0
        %625 = vmatmul.mubr.f32.gmra.mrb[0].mxu0 %v462
        %v626 = vpop.f32.mrb[0].mxu0
        %v627 = vadd.f32 %v559, %v626
        %v628 = vpop.f32.mrb[0].mxu0
        %629 = vmatprep.mubr.f32.mxu0 0.0
        %630 = vmatmul.mubr.f32.gmra.mrb[0].mxu0 %v467
        %v631 = vpop.f32.mrb[0].mxu0
        %v632 = vadd.f32 %v559, %v631
        %v633 = vpop.f32.mrb[0].mxu0
        %634 = vmatprep.mubr.f32.mxu0 0.0
        %635 = vmatmul.mubr.f32.gmra.mrb[0].mxu0 %v472
        %v636 = vpop.f32.mrb[0].mxu0
        %v637 = vadd.f32 %v559, %v636
        %v638 = vpop.f32.mrb[0].mxu0
        %639 = vmatprep.mubr.f32.mxu0 0.0
        %640 = vmatmul.mubr.f32.gmra.mrb[0].mxu0 %v477
        %v641 = vpop.f32.mrb[0].mxu0
        %v642 = vadd.f32 %v559, %v641
        %v643 = vpop.f32.mrb[0].mxu0
        %644 = vmatprep.mubr.f32.mxu0 0.0
        %645 = vmatmul.mubr.f32.gmra.mrb[0].mxu0 %v482
        %v646 = vpop.f32.mrb[0].mxu0
        %v647 = vadd.f32 %v559, %v646
        %v648 = vpop.f32.mrb[0].mxu0
        %649 = vmatprep.mubr.f32.mxu0 0.0
        %650 = vmatmul.mubr.f32.gmra.mrb[0].mxu0 %v487
        %v651 = vpop.f32.mrb[0].mxu0
        %v652 = vadd.f32 %v559, %v651
        %v653 = vpop.f32.mrb[0].mxu0
        %654 = vmatprep.mubr.f32.mxu0 0.0
        %655 = vmatmul.mubr.f32.gmra.mrb[0].mxu0 %v492
        %v656 = vpop.f32.mrb[0].mxu0
        %v657 = vadd.f32 %v559, %v656
        %v658 = vpop.f32.mrb[0].mxu0
        %659 = vmatprep.mubr.f32.mxu0 0.0
        %660 = vmatmul.mubr.f32.gmra.mrb[0].mxu0 %v497
        %v661 = vpop.f32.mrb[0].mxu0
        %v662 = vadd.f32 %v559, %v661
        %v663 = vpop.f32.mrb[0].mxu0
        %664 = vmatprep.mubr.f32.mxu0 0.0
        %665 = vmatmul.mubr.f32.gmra.mrb[0].mxu0 %v502
        %v666 = vpop.f32.mrb[0].mxu0
        %v667 = vadd.f32 %v559, %v666
        %v668 = vpop.f32.mrb[0].mxu0
        %669 = vmatprep.mubr.f32.mxu0 0.0
        %670 = vmatmul.mubr.f32.gmra.mrb[0].mxu0 %v507
        %v671 = vpop.f32.mrb[0].mxu0
        %v672 = vadd.f32 %v559, %v671
        %v673 = vpop.f32.mrb[0].mxu0
        %674 = vmatprep.mubr.f32.mxu0 0.0
        %675 = vmatmul.mubr.f32.gmra.mrb[0].mxu0 %v512
        %v676 = vpop.f32.mrb[0].mxu0
        %v677 = vadd.f32 %v559, %v676
        %v678 = vpop.f32.mrb[0].mxu0
        %679 = vmatprep.mubr.f32.mxu0 0.0
        %680 = vmatmul.mubr.f32.gmra.mrb[0].mxu0 %v517
        %v681 = vpop.f32.mrb[0].mxu0
        %v682 = vadd.f32 %v559, %v681
        %v683 = vpop.f32.mrb[0].mxu0
        %684 = vmatprep.mubr.f32.mxu0 0.0
        %685 = vmatmul.mubr.f32.gmra.mrb[0].mxu0 %v522
        %v686 = vpop.f32.mrb[0].mxu0
        %v687 = vadd.f32 %v559, %v686
        %v688 = vpop.f32.mrb[0].mxu0
        %689 = vmatprep.mubr.f32.mxu0 0.0
        %690 = vmatmul.mubr.f32.gmra.mrb[0].mxu0 %v527
        %v691 = vpop.f32.mrb[0].mxu0
        %v692 = vadd.f32 %v559, %v691
        %v693 = vpop.f32.mrb[0].mxu0
        %694 = vmatprep.mubr.f32.mxu0 0.0
        %695 = vmatmul.mubr.f32.gmra.mrb[0].mxu0 %v532
        %v696 = vpop.f32.mrb[0].mxu0
        %v697 = vadd.f32 %v559, %v696
        %v698 = vpop.f32.mrb[0].mxu0
        %699 = vmatprep.mubr.f32.mxu0 0.0
        %700 = vmatmul.mubr.f32.gmra.mrb[0].mxu0 %v537
        %v701 = vpop.f32.mrb[0].mxu0
        %v702 = vadd.f32 %v559, %v701
        %v703 = vpop.f32.mrb[0].mxu0
        %704 = vdwg.mxu0
        %v705 = vadd.f32 %v357, %v627
        %v706 = vadd.f32 %v358, %v632
        %v707 = vadd.f32 %v359, %v637
        %v708 = vadd.f32 %v360, %v642
        %v709 = vadd.f32 %v361, %v647
        %v710 = vadd.f32 %v362, %v652
        %v711 = vadd.f32 %v363, %v657
        %v712 = vadd.f32 %v364, %v662
        %v713 = vadd.f32 %v365, %v667
        %v714 = vadd.f32 %v366, %v672
        %v715 = vadd.f32 %v367, %v677
        %v716 = vadd.f32 %v368, %v682
        %v717 = vadd.f32 %v369, %v687
        %v718 = vadd.f32 %v370, %v692
        %v719 = vadd.f32 %v371, %v697
        %v720 = vadd.f32 %v372, %v702
        %721 = vadd.xlane.f32.xlu0 %v705
        %v722 = vpop.xlane.xlu0 %721
        %723 = vadd.xlane.f32.xlu0 %v706
        %v724 = vpop.xlane.xlu0 %723
        %725 = vadd.xlane.f32.xlu0 %v707
        %v726 = vpop.xlane.xlu0 %725
        %727 = vadd.xlane.f32.xlu0 %v708
        %v728 = vpop.xlane.xlu0 %727
        %729 = vadd.xlane.f32.xlu0 %v709
        %v730 = vpop.xlane.xlu0 %729
        %731 = vadd.xlane.f32.xlu0 %v710
        %v732 = vpop.xlane.xlu0 %731
        %733 = vadd.xlane.f32.xlu0 %v711
        %v734 = vpop.xlane.xlu0 %733
        %735 = vadd.xlane.f32.xlu0 %v712
        %v736 = vpop.xlane.xlu0 %735
        %737 = vadd.xlane.f32.xlu0 %v713
        %v738 = vpop.xlane.xlu0 %737
        %739 = vadd.xlane.f32.xlu0 %v714
        %v740 = vpop.xlane.xlu0 %739
        %741 = vadd.xlane.f32.xlu0 %v715
        %v742 = vpop.xlane.xlu0 %741
        %743 = vadd.xlane.f32.xlu0 %v716
        %v744 = vpop.xlane.xlu0 %743
        %745 = vadd.xlane.f32.xlu0 %v717
        %v746 = vpop.xlane.xlu0 %745
        %747 = vadd.xlane.f32.xlu0 %v718
        %v748 = vpop.xlane.xlu0 %747
        %749 = vadd.xlane.f32.xlu0 %v719
        %v750 = vpop.xlane.xlu0 %749
        %751 = vadd.xlane.f32.xlu0 %v720
        %v752 = vpop.xlane.xlu0 %751
        %v753 = vrcp.pop 128.0
        %v754 = vmul.f32 %v722, %v753
        %v755 = vmul.f32 %v724, %v753
        %v756 = vmul.f32 %v726, %v753
        %v757 = vmul.f32 %v728, %v753
        %v758 = vmul.f32 %v730, %v753
        %v759 = vmul.f32 %v732, %v753
        %v760 = vmul.f32 %v734, %v753
        %v761 = vmul.f32 %v736, %v753
        %v762 = vmul.f32 %v738, %v753
        %v763 = vmul.f32 %v740, %v753
        %v764 = vmul.f32 %v742, %v753
        %v765 = vmul.f32 %v744, %v753
        %v766 = vmul.f32 %v746, %v753
        %v767 = vmul.f32 %v748, %v753
        %v768 = vmul.f32 %v750, %v753
        %v769 = vmul.f32 %v752, %v753
        %v770 = vsub.f32 %v705, %v754
        %v771 = vsub.f32 %v706, %v755
        %v772 = vsub.f32 %v707, %v756
        %v773 = vsub.f32 %v708, %v757
        %v774 = vsub.f32 %v709, %v758
        %v775 = vsub.f32 %v710, %v759
        %v776 = vsub.f32 %v711, %v760
        %v777 = vsub.f32 %v712, %v761
        %v778 = vsub.f32 %v713, %v762
        %v779 = vsub.f32 %v714, %v763
        %v780 = vsub.f32 %v715, %v764
        %v781 = vsub.f32 %v716, %v765
        %v782 = vsub.f32 %v717, %v766
        %v783 = vsub.f32 %v718, %v767
        %v784 = vsub.f32 %v719, %v768
        %v785 = vsub.f32 %v720, %v769
        %v786 = vmul.f32 %v770, %v770
        %v787 = vmul.f32 %v771, %v771
        %v788 = vmul.f32 %v772, %v772
        %v789 = vmul.f32 %v773, %v773
        %v790 = vmul.f32 %v774, %v774
        %v791 = vmul.f32 %v775, %v775
        %v792 = vmul.f32 %v776, %v776
        %v793 = vmul.f32 %v777, %v777
        %v794 = vmul.f32 %v778, %v778
        %v795 = vmul.f32 %v779, %v779
        %v796 = vmul.f32 %v780, %v780
        %v797 = vmul.f32 %v781, %v781
        %v798 = vmul.f32 %v782, %v782
        %v799 = vmul.f32 %v783, %v783
        %v800 = vmul.f32 %v784, %v784
        %v801 = vmul.f32 %v785, %v785
        %802 = vadd.xlane.f32.xlu0 %v786
        %v803 = vpop.xlane.xlu0 %802
        %804 = vadd.xlane.f32.xlu0 %v787
        %v805 = vpop.xlane.xlu0 %804
        %806 = vadd.xlane.f32.xlu0 %v788
        %v807 = vpop.xlane.xlu0 %806
        %808 = vadd.xlane.f32.xlu0 %v789
        %v809 = vpop.xlane.xlu0 %808
        %810 = vadd.xlane.f32.xlu0 %v790
        %v811 = vpop.xlane.xlu0 %810
        %812 = vadd.xlane.f32.xlu0 %v791
        %v813 = vpop.xlane.xlu0 %812
        %814 = vadd.xlane.f32.xlu0 %v792
        %v815 = vpop.xlane.xlu0 %814
        %816 = vadd.xlane.f32.xlu0 %v793
        %v817 = vpop.xlane.xlu0 %816
        %818 = vadd.xlane.f32.xlu0 %v794
        %v819 = vpop.xlane.xlu0 %818
        %820 = vadd.xlane.f32.xlu0 %v795
        %v821 = vpop.xlane.xlu0 %820
        %822 = vadd.xlane.f32.xlu0 %v796
        %v823 = vpop.xlane.xlu0 %822
        %824 = vadd.xlane.f32.xlu0 %v797
        %v825 = vpop.xlane.xlu0 %824
        %826 = vadd.xlane.f32.xlu0 %v798
        %v827 = vpop.xlane.xlu0 %826
        %828 = vadd.xlane.f32.xlu0 %v799
        %v829 = vpop.xlane.xlu0 %828
        %830 = vadd.xlane.f32.xlu0 %v800
        %v831 = vpop.xlane.xlu0 %830
        %832 = vadd.xlane.f32.xlu0 %v801
        %v833 = vpop.xlane.xlu0 %832
        %v834 = vmul.f32 %v803, %v753
        %v835 = vmul.f32 %v805, %v753
        %v836 = vmul.f32 %v807, %v753
        %v837 = vmul.f32 %v809, %v753
        %v838 = vmul.f32 %v811, %v753
        %v839 = vmul.f32 %v813, %v753
        %v840 = vmul.f32 %v815, %v753
        %v841 = vmul.f32 %v817, %v753
        %v842 = vmul.f32 %v819, %v753
        %v843 = vmul.f32 %v821, %v753
        %v844 = vmul.f32 %v823, %v753
        %v845 = vmul.f32 %v825, %v753
        %v846 = vmul.f32 %v827, %v753
        %v847 = vmul.f32 %v829, %v753
        %v848 = vmul.f32 %v831, %v753
        %v849 = vmul.f32 %v833, %v753
        %v850 = vadd.f32 %v834, 1e-05
        %v851 = vadd.f32 %v835, 1e-05
        %v852 = vadd.f32 %v836, 1e-05
        %v853 = vadd.f32 %v837, 1e-05
        %v854 = vadd.f32 %v838, 1e-05
        %v855 = vadd.f32 %v839, 1e-05
        %v856 = vadd.f32 %v840, 1e-05
        %v857 = vadd.f32 %v841, 1e-05
        %v858 = vadd.f32 %v842, 1e-05
        %v859 = vadd.f32 %v843, 1e-05
        %v860 = vadd.f32 %v844, 1e-05
        %v861 = vadd.f32 %v845, 1e-05
        %v862 = vadd.f32 %v846, 1e-05
        %v863 = vadd.f32 %v847, 1e-05
        %v864 = vadd.f32 %v848, 1e-05
        %v865 = vadd.f32 %v849, 1e-05
        %v866 = vrsqrt.pop %v850
        %v867 = vrsqrt.pop %v851
        %v868 = vrsqrt.pop %v852
        %v869 = vrsqrt.pop %v853
        %v870 = vrsqrt.pop %v854
        %v871 = vrsqrt.pop %v855
        %v872 = vrsqrt.pop %v856
        %v873 = vrsqrt.pop %v857
        %v874 = vrsqrt.pop %v858
        %v875 = vrsqrt.pop %v859
        %v876 = vrsqrt.pop %v860
        %v877 = vrsqrt.pop %v861
        %v878 = vrsqrt.pop %v862
        %v879 = vrsqrt.pop %v863
        %v880 = vrsqrt.pop %v864
        %v881 = vrsqrt.pop %v865
        %v882 = vmul.f32 %v770, %v866
        %v883 = vmul.f32 %v771, %v867
        %v884 = vmul.f32 %v772, %v868
        %v885 = vmul.f32 %v773, %v869
        %v886 = vmul.f32 %v774, %v870
        %v887 = vmul.f32 %v775, %v871
        %v888 = vmul.f32 %v776, %v872
        %v889 = vmul.f32 %v777, %v873
        %v890 = vmul.f32 %v778, %v874
        %v891 = vmul.f32 %v779, %v875
        %v892 = vmul.f32 %v780, %v876
        %v893 = vmul.f32 %v781, %v877
        %v894 = vmul.f32 %v782, %v878
        %v895 = vmul.f32 %v783, %v879
        %v896 = vmul.f32 %v784, %v880
        %v897 = vmul.f32 %v785, %v881
        %v898 = vlaneseq
        %v899 = vshrl.u32 %v898, 7
        %v900 = vsub.s32 2, %v899
        %v901 = vrot.slane %v373, %v900
        %v902 = vmul.f32 %v882, %v901
        %v903 = vmul.f32 %v883, %v901
        %v904 = vmul.f32 %v884, %v901
        %v905 = vmul.f32 %v885, %v901
        %v906 = vmul.f32 %v886, %v901
        %v907 = vmul.f32 %v887, %v901
        %v908 = vmul.f32 %v888, %v901
        %v909 = vmul.f32 %v889, %v901
        %v910 = vmul.f32 %v890, %v901
        %v911 = vmul.f32 %v891, %v901
        %v912 = vmul.f32 %v892, %v901
        %v913 = vmul.f32 %v893, %v901
        %v914 = vmul.f32 %v894, %v901
        %v915 = vmul.f32 %v895, %v901
        %v916 = vmul.f32 %v896, %v901
        %v917 = vmul.f32 %v897, %v901
        %v918 = vlaneseq
        %v919 = vshrl.u32 %v918, 7
        %v920 = vsub.s32 3, %v919
        %v921 = vrot.slane %v373, %v920
        %v922 = vadd.f32 %v902, %v921
        %v923 = vadd.f32 %v903, %v921
        %v924 = vadd.f32 %v904, %v921
        %v925 = vadd.f32 %v905, %v921
        %v926 = vadd.f32 %v906, %v921
        %v927 = vadd.f32 %v907, %v921
        %v928 = vadd.f32 %v908, %v921
        %v929 = vadd.f32 %v909, %v921
        %v930 = vadd.f32 %v910, %v921
        %v931 = vadd.f32 %v911, %v921
        %v932 = vadd.f32 %v912, %v921
        %v933 = vadd.f32 %v913, %v921
        %v934 = vadd.f32 %v914, %v921
        %v935 = vadd.f32 %v915, %v921
        %v936 = vadd.f32 %v916, %v921
        %v937 = vadd.f32 %v917, %v921
        %v938 = vld [vmem:[#allocation8] sm:$0xff]
        %v939 = vld [vmem:[#allocation8 + $0x8] sm:$0xff]
        %v940 = vld [vmem:[#allocation8 + $0x10] sm:$0xff]
        %v941 = vld [vmem:[#allocation8 + $0x18] sm:$0xff]
        %v942 = vld [vmem:[#allocation8 + $0x20] sm:$0xff]
        %v943 = vld [vmem:[#allocation8 + $0x28] sm:$0xff]
        %v944 = vld [vmem:[#allocation8 + $0x30] sm:$0xff]
        %v945 = vld [vmem:[#allocation8 + $0x38] sm:$0xff]
        %v946 = vld [vmem:[#allocation8 + $0x40] sm:$0xff]
        %v947 = vld [vmem:[#allocation8 + $0x48] sm:$0xff]
        %v948 = vld [vmem:[#allocation8 + $0x50] sm:$0xff]
        %v949 = vld [vmem:[#allocation8 + $0x58] sm:$0xff]
        %v950 = vld [vmem:[#allocation8 + $0x60] sm:$0xff]
        %v951 = vld [vmem:[#allocation8 + $0x68] sm:$0xff]
        %v952 = vld [vmem:[#allocation8 + $0x70] sm:$0xff]
        %v953 = vld [vmem:[#allocation8 + $0x78] sm:$0xff]
        %v954 = vld [vmem:[#allocation8 + $0x80] sm:$0xff]
        %v955 = vld [vmem:[#allocation8 + $0x88] sm:$0xff]
        %v956 = vld [vmem:[#allocation8 + $0x90] sm:$0xff]
        %v957 = vld [vmem:[#allocation8 + $0x98] sm:$0xff]
        %v958 = vld [vmem:[#allocation8 + $0xa0] sm:$0xff]
        %v959 = vld [vmem:[#allocation8 + $0xa8] sm:$0xff]
        %v960 = vld [vmem:[#allocation8 + $0xb0] sm:$0xff]
        %v961 = vld [vmem:[#allocation8 + $0xb8] sm:$0xff]
        %v962 = vld [vmem:[#allocation8 + $0xc0] sm:$0xff]
        %v963 = vld [vmem:[#allocation8 + $0xc8] sm:$0xff]
        %v964 = vld [vmem:[#allocation8 + $0xd0] sm:$0xff]
        %v965 = vld [vmem:[#allocation8 + $0xd8] sm:$0xff]
        %v966 = vld [vmem:[#allocation8 + $0xe0] sm:$0xff]
        %v967 = vld [vmem:[#allocation8 + $0xe8] sm:$0xff]
        %v968 = vld [vmem:[#allocation8 + $0xf0] sm:$0xff]
        %v969 = vld [vmem:[#allocation8 + $0xf8] sm:$0xff]
        %v971 = vlaneseq
        %v972 = vshrl.u32 %v971, 7
        %v973 = vsub.s32 0, %v972
        %v974 = vrot.slane %v374, %v973
        %v975 = vlaneseq
        %v976 = vshrl.u32 %v975, 7
        %v977 = vsub.s32 1, %v976
        %v978 = vrot.slane %v374, %v977
        %981 = vmatprep.subr.mxu0 %v939
        %982 = vmatpush1.msra.mxu0 %v938
        %983 = vmatprep.subr.mxu0 %v941
        %984 = vmatpush1.msra.mxu0 %v940
        %985 = vmatprep.subr.mxu0 %v943
        %986 = vmatpush1.msra.mxu0 %v942
        %987 = vmatprep.subr.mxu0 %v945
        %988 = vmatpush1.msra.mxu0 %v944
        %989 = vmatprep.subr.mxu0 %v947
        %990 = vmatpush1.msra.mxu0 %v946
        %991 = vmatprep.subr.mxu0 %v949
        %992 = vmatpush1.msra.mxu0 %v948
        %993 = vmatprep.subr.mxu0 %v951
        %994 = vmatpush1.msra.mxu0 %v950
        %995 = vmatprep.subr.mxu0 %v953
        %996 = vmatpush1.msra.mxu0 %v952
        %997 = vmatprep.subr.mxu0 %v955
        %998 = vmatpush1.msra.mxu0 %v954
        %999 = vmatprep.subr.mxu0 %v957
        %1000 = vmatpush1.msra.mxu0 %v956
        %1001 = vmatprep.subr.mxu0 %v959
        %1002 = vmatpush1.msra.mxu0 %v958
        %1003 = vmatprep.subr.mxu0 %v961
        %1004 = vmatpush1.msra.mxu0 %v960
        %1005 = vmatprep.subr.mxu0 %v963
        %1006 = vmatpush1.msra.mxu0 %v962
        %1007 = vmatprep.subr.mxu0 %v965
        %1008 = vmatpush1.msra.mxu0 %v964
        %1009 = vmatprep.subr.mxu0 %v967
        %1010 = vmatpush1.msra.mxu0 %v966
        %1011 = vmatprep.subr.mxu0 %v969
        %1012 = vmatpush1.msra.mxu0 %v968
        %1013 = vmatprep.subr.mxu0 0.0
        %1014 = vmatpush1.msra.mxu0 0.0
        %1015 = vmatprep.subr.mxu0 0.0
        %1016 = vmatpush1.msra.mxu0 0.0
        %1017 = vmatprep.subr.mxu0 0.0
        %1018 = vmatpush1.msra.mxu0 0.0
        %1019 = vmatprep.subr.mxu0 0.0
        %1020 = vmatpush1.msra.mxu0 0.0
        %1021 = vmatprep.subr.mxu0 0.0
        %1022 = vmatpush1.msra.mxu0 0.0
        %1023 = vmatprep.subr.mxu0 0.0
        %1024 = vmatpush1.msra.mxu0 0.0
        %1025 = vmatprep.subr.mxu0 0.0
        %1026 = vmatpush1.msra.mxu0 0.0
        %1027 = vmatprep.subr.mxu0 0.0
        %1028 = vmatpush1.msra.mxu0 0.0
        %1029 = vmatprep.subr.mxu0 0.0
        %1030 = vmatpush1.msra.mxu0 0.0
        %1031 = vmatprep.subr.mxu0 0.0
        %1032 = vmatpush1.msra.mxu0 0.0
        %1033 = vmatprep.subr.mxu0 0.0
        %1034 = vmatpush1.msra.mxu0 0.0
        %1035 = vmatprep.subr.mxu0 0.0
        %1036 = vmatpush1.msra.mxu0 0.0
        %1037 = vmatprep.subr.mxu0 0.0
        %1038 = vmatpush1.msra.mxu0 0.0
        %1039 = vmatprep.subr.mxu0 0.0
        %1040 = vmatpush1.msra.mxu0 0.0
        %1041 = vmatprep.subr.mxu0 0.0
        %1042 = vmatpush1.msra.mxu0 0.0
        %1043 = vmatprep.subr.mxu0 0.0
        %1044 = vmatpush1.msra.mxu0 0.0
        %1045 = vmatprep.mubr.f32.mxu0 0.0
        %1046 = vmatmul.mubr.f32.gmra.mrb[0].mxu0 %v922
        %v1047 = vpop.f32.mrb[0].mxu0
        %v1048 = vadd.f32 %v974, %v1047
        %v1049 = vpop.f32.mrb[0].mxu0
        %v1050 = vadd.f32 %v978, %v1049
        %1051 = vmatprep.mubr.f32.mxu0 0.0
        %1052 = vmatmul.mubr.f32.gmra.mrb[0].mxu0 %v923
        %v1053 = vpop.f32.mrb[0].mxu0
        %v1054 = vadd.f32 %v974, %v1053
        %v1055 = vpop.f32.mrb[0].mxu0
        %v1056 = vadd.f32 %v978, %v1055
        %1057 = vmatprep.mubr.f32.mxu0 0.0
        %1058 = vmatmul.mubr.f32.gmra.mrb[0].mxu0 %v924
        %v1059 = vpop.f32.mrb[0].mxu0
        %v1060 = vadd.f32 %v974, %v1059
        %v1061 = vpop.f32.mrb[0].mxu0
        %v1062 = vadd.f32 %v978, %v1061
        %1063 = vmatprep.mubr.f32.mxu0 0.0
        %1064 = vmatmul.mubr.f32.gmra.mrb[0].mxu0 %v925
        %v1065 = vpop.f32.mrb[0].mxu0
        %v1066 = vadd.f32 %v974, %v1065
        %v1067 = vpop.f32.mrb[0].mxu0
        %v1068 = vadd.f32 %v978, %v1067
        %1069 = vmatprep.mubr.f32.mxu0 0.0
        %1070 = vmatmul.mubr.f32.gmra.mrb[0].mxu0 %v926
        %v1071 = vpop.f32.mrb[0].mxu0
        %v1072 = vadd.f32 %v974, %v1071
        %v1073 = vpop.f32.mrb[0].mxu0
        %v1074 = vadd.f32 %v978, %v1073
        %1075 = vmatprep.mubr.f32.mxu0 0.0
        %1076 = vmatmul.mubr.f32.gmra.mrb[0].mxu0 %v927
        %v1077 = vpop.f32.mrb[0].mxu0
        %v1078 = vadd.f32 %v974, %v1077
        %v1079 = vpop.f32.mrb[0].mxu0
        %v1080 = vadd.f32 %v978, %v1079
        %1081 = vmatprep.mubr.f32.mxu0 0.0
        %1082 = vmatmul.mubr.f32.gmra.mrb[0].mxu0 %v928
        %v1083 = vpop.f32.mrb[0].mxu0
        %v1084 = vadd.f32 %v974, %v1083
        %v1085 = vpop.f32.mrb[0].mxu0
        %v1086 = vadd.f32 %v978, %v1085
        %1087 = vmatprep.mubr.f32.mxu0 0.0
        %1088 = vmatmul.mubr.f32.gmra.mrb[0].mxu0 %v929
        %v1089 = vpop.f32.mrb[0].mxu0
        %v1090 = vadd.f32 %v974, %v1089
        %v1091 = vpop.f32.mrb[0].mxu0
        %v1092 = vadd.f32 %v978, %v1091
        %1093 = vmatprep.mubr.f32.mxu0 0.0
        %1094 = vmatmul.mubr.f32.gmra.mrb[0].mxu0 %v930
        %v1095 = vpop.f32.mrb[0].mxu0
        %v1096 = vadd.f32 %v974, %v1095
        %v1097 = vpop.f32.mrb[0].mxu0
        %v1098 = vadd.f32 %v978, %v1097
        %1099 = vmatprep.mubr.f32.mxu0 0.0
        %1100 = vmatmul.mubr.f32.gmra.mrb[0].mxu0 %v931
        %v1101 = vpop.f32.mrb[0].mxu0
        %v1102 = vadd.f32 %v974, %v1101
        %v1103 = vpop.f32.mrb[0].mxu0
        %v1104 = vadd.f32 %v978, %v1103
        %1105 = vmatprep.mubr.f32.mxu0 0.0
        %1106 = vmatmul.mubr.f32.gmra.mrb[0].mxu0 %v932
        %v1107 = vpop.f32.mrb[0].mxu0
        %v1108 = vadd.f32 %v974, %v1107
        %v1109 = vpop.f32.mrb[0].mxu0
        %v1110 = vadd.f32 %v978, %v1109
        %1111 = vmatprep.mubr.f32.mxu0 0.0
        %1112 = vmatmul.mubr.f32.gmra.mrb[0].mxu0 %v933
        %v1113 = vpop.f32.mrb[0].mxu0
        %v1114 = vadd.f32 %v974, %v1113
        %v1115 = vpop.f32.mrb[0].mxu0
        %v1116 = vadd.f32 %v978, %v1115
        %1117 = vmatprep.mubr.f32.mxu0 0.0
        %1118 = vmatmul.mubr.f32.gmra.mrb[0].mxu0 %v934
        %v1119 = vpop.f32.mrb[0].mxu0
        %v1120 = vadd.f32 %v974, %v1119
        %v1121 = vpop.f32.mrb[0].mxu0
        %v1122 = vadd.f32 %v978, %v1121
        %1123 = vmatprep.mubr.f32.mxu0 0.0
        %1124 = vmatmul.mubr.f32.gmra.mrb[0].mxu0 %v935
        %v1125 = vpop.f32.mrb[0].mxu0
        %v1126 = vadd.f32 %v974, %v1125
        %v1127 = vpop.f32.mrb[0].mxu0
        %v1128 = vadd.f32 %v978, %v1127
        %1129 = vmatprep.mubr.f32.mxu0 0.0
        %1130 = vmatmul.mubr.f32.gmra.mrb[0].mxu0 %v936
        %v1131 = vpop.f32.mrb[0].mxu0
        %v1132 = vadd.f32 %v974, %v1131
        %v1133 = vpop.f32.mrb[0].mxu0
        %v1134 = vadd.f32 %v978, %v1133
        %1135 = vmatprep.mubr.f32.mxu0 0.0
        %1136 = vmatmul.mubr.f32.gmra.mrb[0].mxu0 %v937
        %v1137 = vpop.f32.mrb[0].mxu0
        %v1138 = vadd.f32 %v974, %v1137
        %v1139 = vpop.f32.mrb[0].mxu0
        %v1140 = vadd.f32 %v978, %v1139
        %1141 = vdwg.mxu0
        %v1142 = vmax.f32 %v1048, 0.0
        %v1143 = vmax.f32 %v1050, 0.0
        %v1144 = vmax.f32 %v1054, 0.0
        %v1145 = vmax.f32 %v1056, 0.0
        %v1146 = vmax.f32 %v1060, 0.0
        %v1147 = vmax.f32 %v1062, 0.0
        %v1148 = vmax.f32 %v1066, 0.0
        %v1149 = vmax.f32 %v1068, 0.0
        %v1150 = vmax.f32 %v1072, 0.0
        %v1151 = vmax.f32 %v1074, 0.0
        %v1152 = vmax.f32 %v1078, 0.0
        %v1153 = vmax.f32 %v1080, 0.0
        %v1154 = vmax.f32 %v1084, 0.0
        %v1155 = vmax.f32 %v1086, 0.0
        %v1156 = vmax.f32 %v1090, 0.0
        %v1157 = vmax.f32 %v1092, 0.0
        %v1158 = vmax.f32 %v1096, 0.0
        %v1159 = vmax.f32 %v1098, 0.0
        %v1160 = vmax.f32 %v1102, 0.0
        %v1161 = vmax.f32 %v1104, 0.0
        %v1162 = vmax.f32 %v1108, 0.0
        %v1163 = vmax.f32 %v1110, 0.0
        %v1164 = vmax.f32 %v1114, 0.0
        %v1165 = vmax.f32 %v1116, 0.0
        %v1166 = vmax.f32 %v1120, 0.0
        %v1167 = vmax.f32 %v1122, 0.0
        %v1168 = vmax.f32 %v1126, 0.0
        %v1169 = vmax.f32 %v1128, 0.0
        %v1170 = vmax.f32 %v1132, 0.0
        %v1171 = vmax.f32 %v1134, 0.0
        %v1172 = vmax.f32 %v1138, 0.0
        %v1173 = vmax.f32 %v1140, 0.0
        %v1174 = vld [vmem:[#allocation10] sm:$0xff]
        %v1175 = vld [vmem:[#allocation10 + $0x8] sm:$0xff]
        %v1176 = vld [vmem:[#allocation10 + $0x10] sm:$0xff]
        %v1177 = vld [vmem:[#allocation10 + $0x18] sm:$0xff]
        %v1178 = vld [vmem:[#allocation10 + $0x20] sm:$0xff]
        %v1179 = vld [vmem:[#allocation10 + $0x28] sm:$0xff]
        %v1180 = vld [vmem:[#allocation10 + $0x30] sm:$0xff]
        %v1181 = vld [vmem:[#allocation10 + $0x38] sm:$0xff]
        %v1182 = vld [vmem:[#allocation10 + $0x40] sm:$0xff]
        %v1183 = vld [vmem:[#allocation10 + $0x48] sm:$0xff]
        %v1184 = vld [vmem:[#allocation10 + $0x50] sm:$0xff]
        %v1185 = vld [vmem:[#allocation10 + $0x58] sm:$0xff]
        %v1186 = vld [vmem:[#allocation10 + $0x60] sm:$0xff]
        %v1187 = vld [vmem:[#allocation10 + $0x68] sm:$0xff]
        %v1188 = vld [vmem:[#allocation10 + $0x70] sm:$0xff]
        %v1189 = vld [vmem:[#allocation10 + $0x78] sm:$0xff]
        %v1190 = vld [vmem:[#allocation10 + $0x80] sm:$0xff]
        %v1191 = vld [vmem:[#allocation10 + $0x88] sm:$0xff]
        %v1192 = vld [vmem:[#allocation10 + $0x90] sm:$0xff]
        %v1193 = vld [vmem:[#allocation10 + $0x98] sm:$0xff]
        %v1194 = vld [vmem:[#allocation10 + $0xa0] sm:$0xff]
        %v1195 = vld [vmem:[#allocation10 + $0xa8] sm:$0xff]
        %v1196 = vld [vmem:[#allocation10 + $0xb0] sm:$0xff]
        %v1197 = vld [vmem:[#allocation10 + $0xb8] sm:$0xff]
        %v1198 = vld [vmem:[#allocation10 + $0xc0] sm:$0xff]
        %v1199 = vld [vmem:[#allocation10 + $0xc8] sm:$0xff]
        %v1200 = vld [vmem:[#allocation10 + $0xd0] sm:$0xff]
        %v1201 = vld [vmem:[#allocation10 + $0xd8] sm:$0xff]
        %v1202 = vld [vmem:[#allocation10 + $0xe0] sm:$0xff]
        %v1203 = vld [vmem:[#allocation10 + $0xe8] sm:$0xff]
        %v1204 = vld [vmem:[#allocation10 + $0xf0] sm:$0xff]
        %v1205 = vld [vmem:[#allocation10 + $0xf8] sm:$0xff]
        %v1206 = vlaneseq
        %v1207 = vshrl.u32 %v1206, 7
        %v1208 = vsub.s32 4, %v1207
        %v1209 = vrot.slane %v373, %v1208
        %1210 = vmatprep.subr.mxu0 0.0
        %1211 = vmatpush1.msra.mxu0 %v1174
        %1212 = vmatprep.subr.mxu0 0.0
        %1213 = vmatpush1.msra.mxu0 %v1175
        %1214 = vmatprep.subr.mxu0 0.0
        %1215 = vmatpush1.msra.mxu0 %v1176
        %1216 = vmatprep.subr.mxu0 0.0
        %1217 = vmatpush1.msra.mxu0 %v1177
        %1218 = vmatprep.subr.mxu0 0.0
        %1219 = vmatpush1.msra.mxu0 %v1178
        %1220 = vmatprep.subr.mxu0 0.0
        %1221 = vmatpush1.msra.mxu0 %v1179
        %1222 = vmatprep.subr.mxu0 0.0
        %1223 = vmatpush1.msra.mxu0 %v1180
        %1224 = vmatprep.subr.mxu0 0.0
        %1225 = vmatpush1.msra.mxu0 %v1181
        %1226 = vmatprep.subr.mxu0 0.0
        %1227 = vmatpush1.msra.mxu0 %v1182
        %1228 = vmatprep.subr.mxu0 0.0
        %1229 = vmatpush1.msra.mxu0 %v1183
        %1230 = vmatprep.subr.mxu0 0.0
        %1231 = vmatpush1.msra.mxu0 %v1184
        %1232 = vmatprep.subr.mxu0 0.0
        %1233 = vmatpush1.msra.mxu0 %v1185
        %1234 = vmatprep.subr.mxu0 0.0
        %1235 = vmatpush1.msra.mxu0 %v1186
        %1236 = vmatprep.subr.mxu0 0.0
        %1237 = vmatpush1.msra.mxu0 %v1187
        %1238 = vmatprep.subr.mxu0 0.0
        %1239 = vmatpush1.msra.mxu0 %v1188
        %1240 = vmatprep.subr.mxu0 0.0
        %1241 = vmatpush1.msra.mxu0 %v1189
        %1242 = vmatprep.subr.mxu0 0.0
        %1243 = vmatpush1.msra.mxu0 %v1190
        %1244 = vmatprep.subr.mxu0 0.0
        %1245 = vmatpush1.msra.mxu0 %v1191
        %1246 = vmatprep.subr.mxu0 0.0
        %1247 = vmatpush1.msra.mxu0 %v1192
        %1248 = vmatprep.subr.mxu0 0.0
        %1249 = vmatpush1.msra.mxu0 %v1193
        %1250 = vmatprep.subr.mxu0 0.0
        %1251 = vmatpush1.msra.mxu0 %v1194
        %1252 = vmatprep.subr.mxu0 0.0
        %1253 = vmatpush1.msra.mxu0 %v1195
        %1254 = vmatprep.subr.mxu0 0.0
        %1255 = vmatpush1.msra.mxu0 %v1196
        %1256 = vmatprep.subr.mxu0 0.0
        %1257 = vmatpush1.msra.mxu0 %v1197
        %1258 = vmatprep.subr.mxu0 0.0
        %1259 = vmatpush1.msra.mxu0 %v1198
        %1260 = vmatprep.subr.mxu0 0.0
        %1261 = vmatpush1.msra.mxu0 %v1199
        %1262 = vmatprep.subr.mxu0 0.0
        %1263 = vmatpush1.msra.mxu0 %v1200
        %1264 = vmatprep.subr.mxu0 0.0
        %1265 = vmatpush1.msra.mxu0 %v1201
        %1266 = vmatprep.subr.mxu0 0.0
        %1267 = vmatpush1.msra.mxu0 %v1202
        %1268 = vmatprep.subr.mxu0 0.0
        %1269 = vmatpush1.msra.mxu0 %v1203
        %1270 = vmatprep.subr.mxu0 0.0
        %1271 = vmatpush1.msra.mxu0 %v1204
        %1272 = vmatprep.subr.mxu0 0.0
        %1273 = vmatpush1.msra.mxu0 %v1205
        %1274 = vmatprep.mubr.f32.mxu0 %v1143
        %1275 = vmatmul.mubr.f32.gmra.mrb[0].mxu0 %v1142
        %v1276 = vpop.f32.mrb[0].mxu0
        %v1277 = vadd.f32 %v1209, %v1276
        %v1278 = vpop.f32.mrb[0].mxu0
        %1279 = vmatprep.mubr.f32.mxu0 %v1145
        %1280 = vmatmul.mubr.f32.gmra.mrb[0].mxu0 %v1144
        %v1281 = vpop.f32.mrb[0].mxu0
        %v1282 = vadd.f32 %v1209, %v1281
        %v1283 = vpop.f32.mrb[0].mxu0
        %1284 = vmatprep.mubr.f32.mxu0 %v1147
        %1285 = vmatmul.mubr.f32.gmra.mrb[0].mxu0 %v1146
        %v1286 = vpop.f32.mrb[0].mxu0
        %v1287 = vadd.f32 %v1209, %v1286
        %v1288 = vpop.f32.mrb[0].mxu0
        %1289 = vmatprep.mubr.f32.mxu0 %v1149
        %1290 = vmatmul.mubr.f32.gmra.mrb[0].mxu0 %v1148
        %v1291 = vpop.f32.mrb[0].mxu0
        %v1292 = vadd.f32 %v1209, %v1291
        %v1293 = vpop.f32.mrb[0].mxu0
        %1294 = vmatprep.mubr.f32.mxu0 %v1151
        %1295 = vmatmul.mubr.f32.gmra.mrb[0].mxu0 %v1150
        %v1296 = vpop.f32.mrb[0].mxu0
        %v1297 = vadd.f32 %v1209, %v1296
        %v1298 = vpop.f32.mrb[0].mxu0
        %1299 = vmatprep.mubr.f32.mxu0 %v1153
        %1300 = vmatmul.mubr.f32.gmra.mrb[0].mxu0 %v1152
        %v1301 = vpop.f32.mrb[0].mxu0
        %v1302 = vadd.f32 %v1209, %v1301
        %v1303 = vpop.f32.mrb[0].mxu0
        %1304 = vmatprep.mubr.f32.mxu0 %v1155
        %1305 = vmatmul.mubr.f32.gmra.mrb[0].mxu0 %v1154
        %v1306 = vpop.f32.mrb[0].mxu0
        %v1307 = vadd.f32 %v1209, %v1306
        %v1308 = vpop.f32.mrb[0].mxu0
        %1309 = vmatprep.mubr.f32.mxu0 %v1157
        %1310 = vmatmul.mubr.f32.gmra.mrb[0].mxu0 %v1156
        %v1311 = vpop.f32.mrb[0].mxu0
        %v1312 = vadd.f32 %v1209, %v1311
        %v1313 = vpop.f32.mrb[0].mxu0
        %1314 = vmatprep.mubr.f32.mxu0 %v1159
        %1315 = vmatmul.mubr.f32.gmra.mrb[0].mxu0 %v1158
        %v1316 = vpop.f32.mrb[0].mxu0
        %v1317 = vadd.f32 %v1209, %v1316
        %v1318 = vpop.f32.mrb[0].mxu0
        %1319 = vmatprep.mubr.f32.mxu0 %v1161
        %1320 = vmatmul.mubr.f32.gmra.mrb[0].mxu0 %v1160
        %v1321 = vpop.f32.mrb[0].mxu0
        %v1322 = vadd.f32 %v1209, %v1321
        %v1323 = vpop.f32.mrb[0].mxu0
        %1324 = vmatprep.mubr.f32.mxu0 %v1163
        %1325 = vmatmul.mubr.f32.gmra.mrb[0].mxu0 %v1162
        %v1326 = vpop.f32.mrb[0].mxu0
        %v1327 = vadd.f32 %v1209, %v1326
        %v1328 = vpop.f32.mrb[0].mxu0
        %1329 = vmatprep.mubr.f32.mxu0 %v1165
        %1330 = vmatmul.mubr.f32.gmra.mrb[0].mxu0 %v1164
        %v1331 = vpop.f32.mrb[0].mxu0
        %v1332 = vadd.f32 %v1209, %v1331
        %v1333 = vpop.f32.mrb[0].mxu0
        %1334 = vmatprep.mubr.f32.mxu0 %v1167
        %1335 = vmatmul.mubr.f32.gmra.mrb[0].mxu0 %v1166
        %v1336 = vpop.f32.mrb[0].mxu0
        %v1337 = vadd.f32 %v1209, %v1336
        %v1338 = vpop.f32.mrb[0].mxu0
        %1339 = vmatprep.mubr.f32.mxu0 %v1169
        %1340 = vmatmul.mubr.f32.gmra.mrb[0].mxu0 %v1168
        %v1341 = vpop.f32.mrb[0].mxu0
        %v1342 = vadd.f32 %v1209, %v1341
        %v1343 = vpop.f32.mrb[0].mxu0
        %1344 = vmatprep.mubr.f32.mxu0 %v1171
        %1345 = vmatmul.mubr.f32.gmra.mrb[0].mxu0 %v1170
        %v1346 = vpop.f32.mrb[0].mxu0
        %v1347 = vadd.f32 %v1209, %v1346
        %v1348 = vpop.f32.mrb[0].mxu0
        %1349 = vmatprep.mubr.f32.mxu0 %v1173
        %1350 = vmatmul.mubr.f32.gmra.mrb[0].mxu0 %v1172
        %v1351 = vpop.f32.mrb[0].mxu0
        %v1352 = vadd.f32 %v1209, %v1351
        %v1353 = vpop.f32.mrb[0].mxu0
        %1354 = vdwg.mxu0
        %v1355 = vadd.f32 %v922, %v1277
        %v1356 = vadd.f32 %v923, %v1282
        %v1357 = vadd.f32 %v924, %v1287
        %v1358 = vadd.f32 %v925, %v1292
        %v1359 = vadd.f32 %v926, %v1297
        %v1360 = vadd.f32 %v927, %v1302
        %v1361 = vadd.f32 %v928, %v1307
        %v1362 = vadd.f32 %v929, %v1312
        %v1363 = vadd.f32 %v930, %v1317
        %v1364 = vadd.f32 %v931, %v1322
        %v1365 = vadd.f32 %v932, %v1327
        %v1366 = vadd.f32 %v933, %v1332
        %v1367 = vadd.f32 %v934, %v1337
        %v1368 = vadd.f32 %v935, %v1342
        %v1369 = vadd.f32 %v936, %v1347
        %v1370 = vadd.f32 %v937, %v1352
        %1371 = vadd.xlane.f32.xlu0 %v1355
        %v1372 = vpop.xlane.xlu0 %1371
        %1373 = vadd.xlane.f32.xlu0 %v1356
        %v1374 = vpop.xlane.xlu0 %1373
        %1375 = vadd.xlane.f32.xlu0 %v1357
        %v1376 = vpop.xlane.xlu0 %1375
        %1377 = vadd.xlane.f32.xlu0 %v1358
        %v1378 = vpop.xlane.xlu0 %1377
        %1379 = vadd.xlane.f32.xlu0 %v1359
        %v1380 = vpop.xlane.xlu0 %1379
        %1381 = vadd.xlane.f32.xlu0 %v1360
        %v1382 = vpop.xlane.xlu0 %1381
        %1383 = vadd.xlane.f32.xlu0 %v1361
        %v1384 = vpop.xlane.xlu0 %1383
        %1385 = vadd.xlane.f32.xlu0 %v1362
        %v1386 = vpop.xlane.xlu0 %1385
        %1387 = vadd.xlane.f32.xlu0 %v1363
        %v1388 = vpop.xlane.xlu0 %1387
        %1389 = vadd.xlane.f32.xlu0 %v1364
        %v1390 = vpop.xlane.xlu0 %1389
        %1391 = vadd.xlane.f32.xlu0 %v1365
        %v1392 = vpop.xlane.xlu0 %1391
        %1393 = vadd.xlane.f32.xlu0 %v1366
        %v1394 = vpop.xlane.xlu0 %1393
        %1395 = vadd.xlane.f32.xlu0 %v1367
        %v1396 = vpop.xlane.xlu0 %1395
        %1397 = vadd.xlane.f32.xlu0 %v1368
        %v1398 = vpop.xlane.xlu0 %1397
        %1399 = vadd.xlane.f32.xlu0 %v1369
        %v1400 = vpop.xlane.xlu0 %1399
        %1401 = vadd.xlane.f32.xlu0 %v1370
        %v1402 = vpop.xlane.xlu0 %1401
        %v1403 = vmul.f32 %v1372, %v753
        %v1404 = vmul.f32 %v1374, %v753
        %v1405 = vmul.f32 %v1376, %v753
        %v1406 = vmul.f32 %v1378, %v753
        %v1407 = vmul.f32 %v1380, %v753
        %v1408 = vmul.f32 %v1382, %v753
        %v1409 = vmul.f32 %v1384, %v753
        %v1410 = vmul.f32 %v1386, %v753
        %v1411 = vmul.f32 %v1388, %v753
        %v1412 = vmul.f32 %v1390, %v753
        %v1413 = vmul.f32 %v1392, %v753
        %v1414 = vmul.f32 %v1394, %v753
        %v1415 = vmul.f32 %v1396, %v753
        %v1416 = vmul.f32 %v1398, %v753
        %v1417 = vmul.f32 %v1400, %v753
        %v1418 = vmul.f32 %v1402, %v753
        %v1419 = vsub.f32 %v1355, %v1403
        %v1420 = vsub.f32 %v1356, %v1404
        %v1421 = vsub.f32 %v1357, %v1405
        %v1422 = vsub.f32 %v1358, %v1406
        %v1423 = vsub.f32 %v1359, %v1407
        %v1424 = vsub.f32 %v1360, %v1408
        %v1425 = vsub.f32 %v1361, %v1409
        %v1426 = vsub.f32 %v1362, %v1410
        %v1427 = vsub.f32 %v1363, %v1411
        %v1428 = vsub.f32 %v1364, %v1412
        %v1429 = vsub.f32 %v1365, %v1413
        %v1430 = vsub.f32 %v1366, %v1414
        %v1431 = vsub.f32 %v1367, %v1415
        %v1432 = vsub.f32 %v1368, %v1416
        %v1433 = vsub.f32 %v1369, %v1417
        %v1434 = vsub.f32 %v1370, %v1418
        %v1435 = vmul.f32 %v1419, %v1419
        %v1436 = vmul.f32 %v1420, %v1420
        %v1437 = vmul.f32 %v1421, %v1421
        %v1438 = vmul.f32 %v1422, %v1422
        %v1439 = vmul.f32 %v1423, %v1423
        %v1440 = vmul.f32 %v1424, %v1424
        %v1441 = vmul.f32 %v1425, %v1425
        %v1442 = vmul.f32 %v1426, %v1426
        %v1443 = vmul.f32 %v1427, %v1427
        %v1444 = vmul.f32 %v1428, %v1428
        %v1445 = vmul.f32 %v1429, %v1429
        %v1446 = vmul.f32 %v1430, %v1430
        %v1447 = vmul.f32 %v1431, %v1431
        %v1448 = vmul.f32 %v1432, %v1432
        %v1449 = vmul.f32 %v1433, %v1433
        %v1450 = vmul.f32 %v1434, %v1434
        %1451 = vadd.xlane.f32.xlu0 %v1435
        %v1452 = vpop.xlane.xlu0 %1451
        %1453 = vadd.xlane.f32.xlu0 %v1436
        %v1454 = vpop.xlane.xlu0 %1453
        %1455 = vadd.xlane.f32.xlu0 %v1437
        %v1456 = vpop.xlane.xlu0 %1455
        %1457 = vadd.xlane.f32.xlu0 %v1438
        %v1458 = vpop.xlane.xlu0 %1457
        %1459 = vadd.xlane.f32.xlu0 %v1439
        %v1460 = vpop.xlane.xlu0 %1459
        %1461 = vadd.xlane.f32.xlu0 %v1440
        %v1462 = vpop.xlane.xlu0 %1461
        %1463 = vadd.xlane.f32.xlu0 %v1441
        %v1464 = vpop.xlane.xlu0 %1463
        %1465 = vadd.xlane.f32.xlu0 %v1442
        %v1466 = vpop.xlane.xlu0 %1465
        %1467 = vadd.xlane.f32.xlu0 %v1443
        %v1468 = vpop.xlane.xlu0 %1467
        %1469 = vadd.xlane.f32.xlu0 %v1444
        %v1470 = vpop.xlane.xlu0 %1469
        %1471 = vadd.xlane.f32.xlu0 %v1445
        %v1472 = vpop.xlane.xlu0 %1471
        %1473 = vadd.xlane.f32.xlu0 %v1446
        %v1474 = vpop.xlane.xlu0 %1473
        %1475 = vadd.xlane.f32.xlu0 %v1447
        %v1476 = vpop.xlane.xlu0 %1475
        %1477 = vadd.xlane.f32.xlu0 %v1448
        %v1478 = vpop.xlane.xlu0 %1477
        %1479 = vadd.xlane.f32.xlu0 %v1449
        %v1480 = vpop.xlane.xlu0 %1479
        %1481 = vadd.xlane.f32.xlu0 %v1450
        %v1482 = vpop.xlane.xlu0 %1481
        %v1483 = vmul.f32 %v1452, %v753
        %v1484 = vmul.f32 %v1454, %v753
        %v1485 = vmul.f32 %v1456, %v753
        %v1486 = vmul.f32 %v1458, %v753
        %v1487 = vmul.f32 %v1460, %v753
        %v1488 = vmul.f32 %v1462, %v753
        %v1489 = vmul.f32 %v1464, %v753
        %v1490 = vmul.f32 %v1466, %v753
        %v1491 = vmul.f32 %v1468, %v753
        %v1492 = vmul.f32 %v1470, %v753
        %v1493 = vmul.f32 %v1472, %v753
        %v1494 = vmul.f32 %v1474, %v753
        %v1495 = vmul.f32 %v1476, %v753
        %v1496 = vmul.f32 %v1478, %v753
        %v1497 = vmul.f32 %v1480, %v753
        %v1498 = vmul.f32 %v1482, %v753
        %v1499 = vadd.f32 %v1483, 1e-05
        %v1500 = vadd.f32 %v1484, 1e-05
        %v1501 = vadd.f32 %v1485, 1e-05
        %v1502 = vadd.f32 %v1486, 1e-05
        %v1503 = vadd.f32 %v1487, 1e-05
        %v1504 = vadd.f32 %v1488, 1e-05
        %v1505 = vadd.f32 %v1489, 1e-05
        %v1506 = vadd.f32 %v1490, 1e-05
        %v1507 = vadd.f32 %v1491, 1e-05
        %v1508 = vadd.f32 %v1492, 1e-05
        %v1509 = vadd.f32 %v1493, 1e-05
        %v1510 = vadd.f32 %v1494, 1e-05
        %v1511 = vadd.f32 %v1495, 1e-05
        %v1512 = vadd.f32 %v1496, 1e-05
        %v1513 = vadd.f32 %v1497, 1e-05
        %v1514 = vadd.f32 %v1498, 1e-05
        %v1515 = vrsqrt.pop %v1499
        %v1516 = vrsqrt.pop %v1500
        %v1517 = vrsqrt.pop %v1501
        %v1518 = vrsqrt.pop %v1502
        %v1519 = vrsqrt.pop %v1503
        %v1520 = vrsqrt.pop %v1504
        %v1521 = vrsqrt.pop %v1505
        %v1522 = vrsqrt.pop %v1506
        %v1523 = vrsqrt.pop %v1507
        %v1524 = vrsqrt.pop %v1508
        %v1525 = vrsqrt.pop %v1509
        %v1526 = vrsqrt.pop %v1510
        %v1527 = vrsqrt.pop %v1511
        %v1528 = vrsqrt.pop %v1512
        %v1529 = vrsqrt.pop %v1513
        %v1530 = vrsqrt.pop %v1514
        %v1531 = vmul.f32 %v1419, %v1515
        %v1532 = vmul.f32 %v1420, %v1516
        %v1533 = vmul.f32 %v1421, %v1517
        %v1534 = vmul.f32 %v1422, %v1518
        %v1535 = vmul.f32 %v1423, %v1519
        %v1536 = vmul.f32 %v1424, %v1520
        %v1537 = vmul.f32 %v1425, %v1521
        %v1538 = vmul.f32 %v1426, %v1522
        %v1539 = vmul.f32 %v1427, %v1523
        %v1540 = vmul.f32 %v1428, %v1524
        %v1541 = vmul.f32 %v1429, %v1525
        %v1542 = vmul.f32 %v1430, %v1526
        %v1543 = vmul.f32 %v1431, %v1527
        %v1544 = vmul.f32 %v1432, %v1528
        %v1545 = vmul.f32 %v1433, %v1529
        %v1546 = vmul.f32 %v1434, %v1530
        %v1547 = vlaneseq
        %v1548 = vshrl.u32 %v1547, 7
        %v1549 = vsub.s32 5, %v1548
        %v1550 = vrot.slane %v373, %v1549
        %v1551 = vmul.f32 %v1531, %v1550
        %v1552 = vmul.f32 %v1532, %v1550
        %v1553 = vmul.f32 %v1533, %v1550
        %v1554 = vmul.f32 %v1534, %v1550
        %v1555 = vmul.f32 %v1535, %v1550
        %v1556 = vmul.f32 %v1536, %v1550
        %v1557 = vmul.f32 %v1537, %v1550
        %v1558 = vmul.f32 %v1538, %v1550
        %v1559 = vmul.f32 %v1539, %v1550
        %v1560 = vmul.f32 %v1540, %v1550
        %v1561 = vmul.f32 %v1541, %v1550
        %v1562 = vmul.f32 %v1542, %v1550
        %v1563 = vmul.f32 %v1543, %v1550
        %v1564 = vmul.f32 %v1544, %v1550
        %v1565 = vmul.f32 %v1545, %v1550
        %v1566 = vmul.f32 %v1546, %v1550
        %v1567 = vlaneseq
        %v1568 = vshrl.u32 %v1567, 7
        %v1569 = vsub.s32 6, %v1568
        %v1570 = vrot.slane %v373, %v1569
        %v1571 = vadd.f32 %v1551, %v1570
        %v1572 = vadd.f32 %v1552, %v1570
        %v1573 = vadd.f32 %v1553, %v1570
        %v1574 = vadd.f32 %v1554, %v1570
        %v1575 = vadd.f32 %v1555, %v1570
        %v1576 = vadd.f32 %v1556, %v1570
        %v1577 = vadd.f32 %v1557, %v1570
        %v1578 = vadd.f32 %v1558, %v1570
        %v1579 = vadd.f32 %v1559, %v1570
        %v1580 = vadd.f32 %v1560, %v1570
        %v1581 = vadd.f32 %v1561, %v1570
        %v1582 = vadd.f32 %v1562, %v1570
        %v1583 = vadd.f32 %v1563, %v1570
        %v1584 = vadd.f32 %v1564, %v1570
        %v1585 = vadd.f32 %v1565, %v1570
        %v1586 = vadd.f32 %v1566, %v1570
        %1587 = vst [vmem:[%s354] sm:$0xff] %v1571
        %1588 = vst [vmem:[%s354 + $0x8] sm:$0xff] %v1572
        %1589 = vst [vmem:[%s354 + $0x10] sm:$0xff] %v1573
        %1590 = vst [vmem:[%s354 + $0x18] sm:$0xff] %v1574
        %1591 = vst [vmem:[%s354 + $0x20] sm:$0xff] %v1575
        %1592 = vst [vmem:[%s354 + $0x28] sm:$0xff] %v1576
        %1593 = vst [vmem:[%s354 + $0x30] sm:$0xff] %v1577
        %1594 = vst [vmem:[%s354 + $0x38] sm:$0xff] %v1578
        %1595 = vst [vmem:[%s354 + $0x40] sm:$0xff] %v1579
        %1596 = vst [vmem:[%s354 + $0x48] sm:$0xff] %v1580
        %1597 = vst [vmem:[%s354 + $0x50] sm:$0xff] %v1581
        %1598 = vst [vmem:[%s354 + $0x58] sm:$0xff] %v1582
        %1599 = vst [vmem:[%s354 + $0x60] sm:$0xff] %v1583
        %1600 = vst [vmem:[%s354 + $0x68] sm:$0xff] %v1584
        %1601 = vst [vmem:[%s354 + $0x70] sm:$0xff] %v1585
        %1602 = vst [vmem:[%s354 + $0x78] sm:$0xff] %v1586
        %s1603 = sand.u32 %s186, 1
        %s1604 = scalar_lea.sflag [#allocation4], %s1603
        %s1605 = sand.u32 %s186, 1
        %s1606 = smul.addr %s1605, 128
        %s1607 = scalar_lea.vmem [#allocation11], %s1606
        // Predicated region
        $region69: #{tpu_custom_call.1} parent=47 // pred_check
          %p1608 = pneg %p196
        $region70: #{tpu_custom_call.1} parent=47 // pred_check_branch
          %1610 = sbr.rel (%p1608) target = $region72
        $region71: #{tpu_custom_call.1} parent=47 // pred_region
          %s1611 = smul.u32 16, %s26
          %s1613 = ssub.s32 2048, 2048
          %1614 = vsyncadd %s1604, %s1613
          %s1615 = smul.addr %s1611, 128
          %s1616 = scalar_lea.hbm %s7, %s1615
          %s1617 = sshll.u32 %s1607, 4
          %s1618 = int_to_ptr.vmem [resolvable:$true] %s1617
          %1623 = dma.vmem_to_hbm [thread:$0]  %s1618, 2048, %s1616, %s1604, 128, 128, 8
        $region72: #{tpu_custom_call.1} parent=47 // pred_fallthru
          _
      $region48: #{tpu_custom_call.1} parent=5 // pred_fallthru
        _
      %p1624 = scmp.le.s32.totalorder 2, %s21
      // Predicated region
      $region73: #{tpu_custom_call.1} parent=5 // pred_check
        %p1625 = pneg %p1624
      $region74: #{tpu_custom_call.1} parent=5 // pred_check_branch
        %1627 = sbr.rel (%p1625) target = $region76
      $region75: #{tpu_custom_call.1} parent=5 // pred_region
        %s1628 = ssub.s32 %s21, 2
        // Predicated region
        $region77: #{tpu_custom_call.1} parent=75 // pred_check
          %p1629 = pneg %p202
        $region78: #{tpu_custom_call.1} parent=75 // pred_check_branch
          %1631 = sbr.rel (%p1629) target = $region80
        $region79: #{tpu_custom_call.1} parent=75 // pred_region
          %s1632 = sand.u32 %s187, 1
          %s1633 = scalar_lea.sflag [#allocation4], %s1632
          %s1634 = sand.u32 %s187, 1
          %s1635 = smul.addr %s1634, 128
          %s1636 = scalar_lea.vmem [#allocation11], %s1635
          %1637 = dma.done %s1633, 2048
        $region80: #{tpu_custom_call.1} parent=75 // pred_fallthru
          _
      $region76: #{tpu_custom_call.1} parent=5 // pred_fallthru
        _
    $region6: #{tpu_custom_call.1} parent=1 // loop_footer
      %s25 = sadd.s32 1, %s21
    $region7: #{tpu_custom_call.1} parent=1 // loop_footer_branch
      %20 = sbr.rel target = $region3
    $region8: #{tpu_custom_call.1} parent=1 // loop_exit
      _
    %1638 = vsyncpa [#allocation3], 1
    %s1639 = scalar_lea.sflag [#allocation3], 1
    %1640 = vsyncpa %s1639, 1
    %1641 = vsyncpa [#allocation6], 1
    %1642 = vsyncpa [#allocation9], 1
    %1643 = vsyncpa [#allocation4], 1
    %s1644 = scalar_lea.sflag [#allocation4], 1
    %1645 = vsyncpa %s1644, 1

</llo_original>
